<compile_context>
chip_gen: v5e
topology: v5e:2x2
jax: 0.10.0
libtpu: 0.0.40
codegen_flags: <defaults>
</compile_context>

<pallas_src>
import functools

import jax
import jax.numpy as jnp
from jax.experimental import pallas as pl
from jax.experimental.pallas import tpu as pltpu


def _sigmoid_eup(x):
    """Exact sigmoid via tanh: 1/(1+exp(-x)) == 0.5*tanh(0.5*x) + 0.5.

    Keeps the transcendental on the EUP slot (free alongside VALU/MXU work)
    instead of a divide's Newton iterations on the VALU.
    """
    return 0.5 * jnp.tanh(0.5 * x) + 0.5


def _lstm_classifier_kernel(x2d_ref, wx_ref, wh_ref, b_ref, wfc_ref, bfc_ref,
                            hseq_ref, logits_ref, *,
                            seq_len, batch_padded, hidden, rec_dtype):
    """Whole LSTM_Classifier forward in ONE kernel invocation (grid=(1,))."""
    H = hidden
    B = batch_padded  # multiple of 8 -> all per-step slices/stores aligned

    # ---- One-shot prologue: input projection for ALL timesteps ------------
    # Single MXU op with M = seq_len*B rows; bias broadcast exactly once.
    gates_x = (jnp.dot(x2d_ref[...].astype(rec_dtype),
                       wx_ref[...].astype(rec_dtype),
                       preferred_element_type=jnp.float32)
               + b_ref[...])                                  # (seq_len*B, 4H)

    # Recurrent weight loaded (and cast) once, held across the unrolled loop.
    # TODO(synk): keep Wh stationary in the MXU across timesteps via
    # pltpu.matmul_push_rhs / matmul_acc_lhs / matmul_pop.
    wh = wh_ref[...].astype(rec_dtype)

    h = jnp.zeros((B, H), jnp.float32)
    c = jnp.zeros((B, H), jnp.float32)

    # ---- Fully-unrolled recurrence (static trip count, seq_len is small) --
    # Every slice index is a static multiple of 8 sublanes, so gate slicing
    # is a free vreg view and each hseq store is an unmasked aligned store
    # into the VMEM-resident output block; HBM writeback is one dense DMA.
    for t in range(seq_len):
        g = gates_x[t * B:(t + 1) * B, :] + jnp.dot(
            h.astype(rec_dtype), wh, preferred_element_type=jnp.float32)
        # Gate packing [f, i, o, g]: one sigmoid over the contiguous 3H slab,
        # one tanh over the last H.
        sig = _sigmoid_eup(g[:, 0:3 * H])
        f_t = sig[:, 0 * H:1 * H]
        i_t = sig[:, 1 * H:2 * H]
        o_t = sig[:, 2 * H:3 * H]
        g_t = jnp.tanh(g[:, 3 * H:4 * H])
        c = c * f_t + i_t * g_t
        h = o_t * jnp.tanh(c)
        hseq_ref[t * B:(t + 1) * B, :] = h.astype(hseq_ref.dtype)

    # ---- Classifier head on the final hidden state -------------------------
    # Output classes lane-padded to 128 -> dense store; wrapper slices back.
    logits_ref[...] = (jnp.dot(h, wfc_ref[...],
                               preferred_element_type=jnp.float32)
                       + bfc_ref[...]).astype(logits_ref.dtype)


def lstm_classifier_forward(x, wx, wh, b, wfc, bfc, *,
                            recurrent_matmul_dtype=jnp.float32):
    """x: (seq_len, B, input_size) f32. Returns (logits (B, classes), h_seq).

    Set recurrent_matmul_dtype=jnp.bfloat16 to run the matmuls with bf16
    operands (f32 accumulation) on the bf16-native MXU of v5e/v6e/v7x; gate
    elementwise math stays f32 either way.
    """
    seq_len, batch, input_size = x.shape
    hidden = wh.shape[0]
    classes = wfc.shape[1]

    SUBLANE = 8
    batch_p = ((batch + SUBLANE - 1) // SUBLANE) * SUBLANE
    padded_classes = max(128, ((classes + 127) // 128) * 128)

    # Free layout plumbing in the wrapper:
    #  - pad batch to a sublane multiple so every in-kernel per-step slice /
    #    store is a full aligned (8,128) tile (padded rows are inert),
    #  - seq-major 2-D view of x,
    #  - lane-padded classifier weights for a dense logits store.
    x_p = jnp.pad(x, ((0, 0), (0, batch_p - batch), (0, 0)))
    x2d = x_p.reshape(seq_len * batch_p, input_size)
    wfc_p = jnp.pad(wfc, ((0, 0), (0, padded_classes - classes)))
    bfc_p = jnp.pad(bfc, ((0, 0), (0, padded_classes - classes)))

    kernel = functools.partial(
        _lstm_classifier_kernel, seq_len=seq_len, batch_padded=batch_p,
        hidden=hidden, rec_dtype=recurrent_matmul_dtype)

    def full(shape):
        # Full-array block, resident in VMEM for the single grid step.
        return pl.BlockSpec(shape, lambda i: (0,) * len(shape))

    grid_spec = pltpu.PrefetchScalarGridSpec(
        num_scalar_prefetch=0,
        grid=(1,),
        in_specs=[
            full((seq_len * batch_p, input_size)),   # x2d
            full((input_size, 4 * hidden)),          # Wx
            full((hidden, 4 * hidden)),              # Wh
            full((1, 4 * hidden)),                   # b
            full((hidden, padded_classes)),          # Wfc (lane-padded)
            full((1, padded_classes)),               # bfc (lane-padded)
        ],
        out_specs=(
            full((seq_len * batch_p, hidden)),       # h_seq (dense 2-D slab)
            full((batch_p, padded_classes)),         # logits (lane-padded)
        ),
    )

    hseq2d, logits_p = pl.pallas_call(
        kernel,
        out_shape=(
            jax.ShapeDtypeStruct((seq_len * batch_p, hidden), jnp.float32),
            jax.ShapeDtypeStruct((batch_p, padded_classes), jnp.float32),
        ),
        grid_spec=grid_spec,
        compiler_params=pltpu.CompilerParams(
            dimension_semantics=("arbitrary",)),
    )(x2d, wx, wh, b, wfc_p, bfc_p)

    h_seq = hseq2d.reshape(seq_len, batch_p, hidden)[:, :batch, :]
    logits = logits_p[:batch, :classes]
    return logits, h_seq


def _reference(x, wx, wh, b, wfc, bfc):
    """Pure-JAX f32 reference identical to the PyTorch forward semantics
    (gate packing [f, i, o, g], matching the kernel/init)."""
    hidden = wh.shape[0]
    B = x.shape[1]
    h0 = jnp.zeros((B, hidden), jnp.float32)
    c0 = jnp.zeros((B, hidden), jnp.float32)

    def step(carry, x_t):
        h, c = carry
        g = x_t @ wx + h @ wh + b
        f_t = jax.nn.sigmoid(g[:, 0 * hidden:1 * hidden])
        i_t = jax.nn.sigmoid(g[:, 1 * hidden:2 * hidden])
        o_t = jax.nn.sigmoid(g[:, 2 * hidden:3 * hidden])
        g_t = jnp.tanh(g[:, 3 * hidden:4 * hidden])
        c = c * f_t + i_t * g_t
        h = o_t * jnp.tanh(c)
        return (h, c), h

    (h_last, _), h_seq = jax.lax.scan(step, (h0, c0), x)
    return h_last @ wfc + bfc[0], h_seq


def _init_params(key, input_size, hidden, classes):
    """Deterministic init mimicking PyTorch Linear's U(-1/sqrt(fan_in), ...).
    Stacked gate weights use packing [f, i, o, g], transposed to (in, out)."""
    ks = jax.random.split(key, 6)

    def uni(k, shape, fan_in):
        bound = 1.0 / jnp.sqrt(fan_in)
        return jax.random.uniform(k, shape, jnp.float32, -bound, bound)

    wx = uni(ks[0], (input_size, 4 * hidden), input_size)
    wh = uni(ks[1], (hidden, 4 * hidden), hidden)
    # Combined bias (per-gate fc1 bias + fc2 bias).
    b = (uni(ks[2], (1, 4 * hidden), input_size)
         + uni(ks[3], (1, 4 * hidden), hidden))
    wfc = uni(ks[4], (hidden, classes), hidden)
    bfc = uni(ks[5], (1, classes), hidden)
    return wx, wh, b, wfc, bfc


if __name__ == "__main__":
    seq_len, batch, input_size = 8, 2, 28
    hidden, classes = 128, 10

    key = jax.random.PRNGKey(0)
    kx, kp = jax.random.split(key)
    x = jax.random.normal(kx, (seq_len, batch, input_size), jnp.float32)
    wx, wh, b, wfc, bfc = _init_params(kp, input_size, hidden, classes)

    ref_logits, ref_hseq = _reference(x, wx, wh, b, wfc, bfc)

    # --- f32 path: exact parity with the PyTorch module ---------------------
    logits, h_seq = lstm_classifier_forward(x, wx, wh, b, wfc, bfc)
    logits = jax.block_until_ready(logits)
    h_seq = jax.block_until_ready(h_seq)
    assert logits.shape == (batch, classes)
    assert h_seq.shape == (seq_len, batch, hidden)
    assert jnp.allclose(logits, ref_logits, atol=1e-4, rtol=1e-4)
    assert jnp.allclose(h_seq, ref_hseq, atol=1e-4, rtol=1e-4)

    # --- bf16-operand recurrent matmul (f32 accumulation / gate math) -------
    logits_bf16, h_seq_bf16 = lstm_classifier_forward(
        x, wx, wh, b, wfc, bfc, recurrent_matmul_dtype=jnp.bfloat16)
    logits_bf16 = jax.block_until_ready(logits_bf16)
    h_seq_bf16 = jax.block_until_ready(h_seq_bf16)
    # Looser tolerance: bf16 operand rounding compounds over the serial
    # recurrence (per the review's correctness note).
    assert jnp.allclose(logits_bf16, ref_logits, atol=5e-2, rtol=0)
    assert jnp.allclose(h_seq_bf16, ref_hseq, atol=5e-2, rtol=0)

    print("KERNEL_OK")
</pallas_src>

<mosaic_0001>
module attributes {stable_mosaic.version = 11 : i64} {
  func.func @_lstm_classifier_kernel(%arg0: i32, %arg1: memref<64x28xf32, #tpu.memory_space<vmem>>, %arg2: memref<28x512xf32, #tpu.memory_space<vmem>>, %arg3: memref<128x512xf32, #tpu.memory_space<vmem>>, %arg4: memref<1x512xf32, #tpu.memory_space<vmem>>, %arg5: memref<128x128xf32, #tpu.memory_space<vmem>>, %arg6: memref<1x128xf32, #tpu.memory_space<vmem>>, %arg7: memref<64x128xf32, #tpu.memory_space<vmem>>, %arg8: memref<8x128xf32, #tpu.memory_space<vmem>>) attributes {dimension_semantics = [#tpu.dimension_semantics<arbitrary>], iteration_bounds = array<i64: 1>, scalar_prefetch = 0 : i64, scratch_operands = 0 : i64, tpu.core_type = #tpu.core_type<tc>, window_params = [{pipeline_mode = #tpu.pipeline_mode<synchronous>, transform_indices = @transform_0, window_bounds = array<i64: 64, 28>}, {pipeline_mode = #tpu.pipeline_mode<synchronous>, transform_indices = @transform_1, window_bounds = array<i64: 28, 512>}, {pipeline_mode = #tpu.pipeline_mode<synchronous>, transform_indices = @transform_2, window_bounds = array<i64: 128, 512>}, {pipeline_mode = #tpu.pipeline_mode<synchronous>, transform_indices = @transform_3, window_bounds = array<i64: 1, 512>}, {pipeline_mode = #tpu.pipeline_mode<synchronous>, transform_indices = @transform_4, window_bounds = array<i64: 128, 128>}, {pipeline_mode = #tpu.pipeline_mode<synchronous>, transform_indices = @transform_5, window_bounds = array<i64: 1, 128>}, {pipeline_mode = #tpu.pipeline_mode<synchronous>, transform_indices = @transform_6, window_bounds = array<i64: 64, 128>}, {pipeline_mode = #tpu.pipeline_mode<synchronous>, transform_indices = @transform_7, window_bounds = array<i64: 8, 128>}]} {
    %c0 = arith.constant 0 : index
    %c0_0 = arith.constant 0 : index
    %0 = vector.load %arg1[%c0, %c0_0] : memref<64x28xf32, #tpu.memory_space<vmem>>, vector<64x28xf32>
    %c0_1 = arith.constant 0 : index
    %c0_2 = arith.constant 0 : index
    %1 = vector.load %arg2[%c0_1, %c0_2] : memref<28x512xf32, #tpu.memory_space<vmem>>, vector<28x512xf32>
    %cst = arith.constant dense<0.000000e+00> : vector<64x512xf32>
    %2 = tpu.matmul %0, %1, %cst {dimension_numbers = #tpu.dot_dimension_numbers<[1], [0], [0], [1], [0, 0, 1, 1], [], []>} : vector<64x28xf32>, vector<28x512xf32>, vector<64x512xf32> -> vector<64x512xf32>
    %c0_3 = arith.constant 0 : index
    %c0_4 = arith.constant 0 : index
    %3 = vector.load %arg4[%c0_3, %c0_4] : memref<1x512xf32, #tpu.memory_space<vmem>>, vector<1x512xf32>
    %4 = vector.broadcast %3 : vector<1x512xf32> to vector<64x512xf32>
    %5 = arith.addf %2, %4 : vector<64x512xf32>
    %c0_5 = arith.constant 0 : index
    %c0_6 = arith.constant 0 : index
    %6 = vector.load %arg3[%c0_5, %c0_6] : memref<128x512xf32, #tpu.memory_space<vmem>>, vector<128x512xf32>
    %cst_7 = arith.constant 0.000000e+00 : f32
    %7 = vector.broadcast %cst_7 : f32 to vector<8x128xf32>
    %cst_8 = arith.constant 0.000000e+00 : f32
    %8 = vector.broadcast %cst_8 : f32 to vector<8x128xf32>
    %9 = vector.extract_strided_slice %5 {offsets = [0, 0], sizes = [8, 512], strides = [1, 1]} : vector<64x512xf32> to vector<8x512xf32>
    %cst_9 = arith.constant dense<0.000000e+00> : vector<8x512xf32>
    %10 = tpu.matmul %7, %6, %cst_9 {dimension_numbers = #tpu.dot_dimension_numbers<[1], [0], [0], [1], [0, 0, 1, 1], [], []>} : vector<8x128xf32>, vector<128x512xf32>, vector<8x512xf32> -> vector<8x512xf32>
    %11 = arith.addf %9, %10 : vector<8x512xf32>
    %12 = vector.extract_strided_slice %11 {offsets = [0, 0], sizes = [8, 384], strides = [1, 1]} : vector<8x512xf32> to vector<8x384xf32>
    %cst_10 = arith.constant 5.000000e-01 : f32
    %13 = vector.broadcast %cst_10 : f32 to vector<8x384xf32>
    %14 = arith.mulf %13, %12 : vector<8x384xf32>
    %15 = math.tanh %14 : vector<8x384xf32>
    %cst_11 = arith.constant 5.000000e-01 : f32
    %16 = vector.broadcast %cst_11 : f32 to vector<8x384xf32>
    %17 = arith.mulf %16, %15 : vector<8x384xf32>
    %cst_12 = arith.constant 5.000000e-01 : f32
    %18 = vector.broadcast %cst_12 : f32 to vector<8x384xf32>
    %19 = arith.addf %17, %18 : vector<8x384xf32>
    %20 = vector.extract_strided_slice %19 {offsets = [0, 0], sizes = [8, 128], strides = [1, 1]} : vector<8x384xf32> to vector<8x128xf32>
    %21 = vector.extract_strided_slice %19 {offsets = [0, 128], sizes = [8, 128], strides = [1, 1]} : vector<8x384xf32> to vector<8x128xf32>
    %22 = vector.extract_strided_slice %19 {offsets = [0, 256], sizes = [8, 128], strides = [1, 1]} : vector<8x384xf32> to vector<8x128xf32>
    %23 = vector.extract_strided_slice %11 {offsets = [0, 384], sizes = [8, 128], strides = [1, 1]} : vector<8x512xf32> to vector<8x128xf32>
    %24 = math.tanh %23 : vector<8x128xf32>
    %25 = arith.mulf %8, %20 : vector<8x128xf32>
    %26 = arith.mulf %21, %24 : vector<8x128xf32>
    %27 = arith.addf %25, %26 : vector<8x128xf32>
    %28 = math.tanh %27 : vector<8x128xf32>
    %29 = arith.mulf %22, %28 : vector<8x128xf32>
    %c0_13 = arith.constant 0 : index
    %c0_14 = arith.constant 0 : index
    %30 = vector.load %arg7[%c0_13, %c0_14] : memref<64x128xf32, #tpu.memory_space<vmem>>, vector<8x128xf32>
    tpu.vector_store %arg7[%c0_13, %c0_14], %29 {strides = array<i32>} : memref<64x128xf32, #tpu.memory_space<vmem>>, vector<8x128xf32>,
    %31 = vector.extract_strided_slice %5 {offsets = [8, 0], sizes = [8, 512], strides = [1, 1]} : vector<64x512xf32> to vector<8x512xf32>
    %cst_15 = arith.constant dense<0.000000e+00> : vector<8x512xf32>
    %32 = tpu.matmul %29, %6, %cst_15 {dimension_numbers = #tpu.dot_dimension_numbers<[1], [0], [0], [1], [0, 0, 1, 1], [], []>} : vector<8x128xf32>, vector<128x512xf32>, vector<8x512xf32> -> vector<8x512xf32>
    %33 = arith.addf %31, %32 : vector<8x512xf32>
    %34 = vector.extract_strided_slice %33 {offsets = [0, 0], sizes = [8, 384], strides = [1, 1]} : vector<8x512xf32> to vector<8x384xf32>
    %cst_16 = arith.constant 5.000000e-01 : f32
    %35 = vector.broadcast %cst_16 : f32 to vector<8x384xf32>
    %36 = arith.mulf %35, %34 : vector<8x384xf32>
    %37 = math.tanh %36 : vector<8x384xf32>
    %cst_17 = arith.constant 5.000000e-01 : f32
    %38 = vector.broadcast %cst_17 : f32 to vector<8x384xf32>
    %39 = arith.mulf %38, %37 : vector<8x384xf32>
    %cst_18 = arith.constant 5.000000e-01 : f32
    %40 = vector.broadcast %cst_18 : f32 to vector<8x384xf32>
    %41 = arith.addf %39, %40 : vector<8x384xf32>
    %42 = vector.extract_strided_slice %41 {offsets = [0, 0], sizes = [8, 128], strides = [1, 1]} : vector<8x384xf32> to vector<8x128xf32>
    %43 = vector.extract_strided_slice %41 {offsets = [0, 128], sizes = [8, 128], strides = [1, 1]} : vector<8x384xf32> to vector<8x128xf32>
    %44 = vector.extract_strided_slice %41 {offsets = [0, 256], sizes = [8, 128], strides = [1, 1]} : vector<8x384xf32> to vector<8x128xf32>
    %45 = vector.extract_strided_slice %33 {offsets = [0, 384], sizes = [8, 128], strides = [1, 1]} : vector<8x512xf32> to vector<8x128xf32>
    %46 = math.tanh %45 : vector<8x128xf32>
    %47 = arith.mulf %27, %42 : vector<8x128xf32>
    %48 = arith.mulf %43, %46 : vector<8x128xf32>
    %49 = arith.addf %47, %48 : vector<8x128xf32>
    %50 = math.tanh %49 : vector<8x128xf32>
    %51 = arith.mulf %44, %50 : vector<8x128xf32>
    %c8 = arith.constant 8 : index
    %c0_19 = arith.constant 0 : index
    %52 = vector.load %arg7[%c8, %c0_19] : memref<64x128xf32, #tpu.memory_space<vmem>>, vector<8x128xf32>
    tpu.vector_store %arg7[%c8, %c0_19], %51 {strides = array<i32>} : memref<64x128xf32, #tpu.memory_space<vmem>>, vector<8x128xf32>,
    %53 = vector.extract_strided_slice %5 {offsets = [16, 0], sizes = [8, 512], strides = [1, 1]} : vector<64x512xf32> to vector<8x512xf32>
    %cst_20 = arith.constant dense<0.000000e+00> : vector<8x512xf32>
    %54 = tpu.matmul %51, %6, %cst_20 {dimension_numbers = #tpu.dot_dimension_numbers<[1], [0], [0], [1], [0, 0, 1, 1], [], []>} : vector<8x128xf32>, vector<128x512xf32>, vector<8x512xf32> -> vector<8x512xf32>
    %55 = arith.addf %53, %54 : vector<8x512xf32>
    %56 = vector.extract_strided_slice %55 {offsets = [0, 0], sizes = [8, 384], strides = [1, 1]} : vector<8x512xf32> to vector<8x384xf32>
    %cst_21 = arith.constant 5.000000e-01 : f32
    %57 = vector.broadcast %cst_21 : f32 to vector<8x384xf32>
    %58 = arith.mulf %57, %56 : vector<8x384xf32>
    %59 = math.tanh %58 : vector<8x384xf32>
    %cst_22 = arith.constant 5.000000e-01 : f32
    %60 = vector.broadcast %cst_22 : f32 to vector<8x384xf32>
    %61 = arith.mulf %60, %59 : vector<8x384xf32>
    %cst_23 = arith.constant 5.000000e-01 : f32
    %62 = vector.broadcast %cst_23 : f32 to vector<8x384xf32>
    %63 = arith.addf %61, %62 : vector<8x384xf32>
    %64 = vector.extract_strided_slice %63 {offsets = [0, 0], sizes = [8, 128], strides = [1, 1]} : vector<8x384xf32> to vector<8x128xf32>
    %65 = vector.extract_strided_slice %63 {offsets = [0, 128], sizes = [8, 128], strides = [1, 1]} : vector<8x384xf32> to vector<8x128xf32>
    %66 = vector.extract_strided_slice %63 {offsets = [0, 256], sizes = [8, 128], strides = [1, 1]} : vector<8x384xf32> to vector<8x128xf32>
    %67 = vector.extract_strided_slice %55 {offsets = [0, 384], sizes = [8, 128], strides = [1, 1]} : vector<8x512xf32> to vector<8x128xf32>
    %68 = math.tanh %67 : vector<8x128xf32>
    %69 = arith.mulf %49, %64 : vector<8x128xf32>
    %70 = arith.mulf %65, %68 : vector<8x128xf32>
    %71 = arith.addf %69, %70 : vector<8x128xf32>
    %72 = math.tanh %71 : vector<8x128xf32>
    %73 = arith.mulf %66, %72 : vector<8x128xf32>
    %c16 = arith.constant 16 : index
    %c0_24 = arith.constant 0 : index
    %74 = vector.load %arg7[%c16, %c0_24] : memref<64x128xf32, #tpu.memory_space<vmem>>, vector<8x128xf32>
    tpu.vector_store %arg7[%c16, %c0_24], %73 {strides = array<i32>} : memref<64x128xf32, #tpu.memory_space<vmem>>, vector<8x128xf32>,
    %75 = vector.extract_strided_slice %5 {offsets = [24, 0], sizes = [8, 512], strides = [1, 1]} : vector<64x512xf32> to vector<8x512xf32>
    %cst_25 = arith.constant dense<0.000000e+00> : vector<8x512xf32>
    %76 = tpu.matmul %73, %6, %cst_25 {dimension_numbers = #tpu.dot_dimension_numbers<[1], [0], [0], [1], [0, 0, 1, 1], [], []>} : vector<8x128xf32>, vector<128x512xf32>, vector<8x512xf32> -> vector<8x512xf32>
    %77 = arith.addf %75, %76 : vector<8x512xf32>
    %78 = vector.extract_strided_slice %77 {offsets = [0, 0], sizes = [8, 384], strides = [1, 1]} : vector<8x512xf32> to vector<8x384xf32>
    %cst_26 = arith.constant 5.000000e-01 : f32
    %79 = vector.broadcast %cst_26 : f32 to vector<8x384xf32>
    %80 = arith.mulf %79, %78 : vector<8x384xf32>
    %81 = math.tanh %80 : vector<8x384xf32>
    %cst_27 = arith.constant 5.000000e-01 : f32
    %82 = vector.broadcast %cst_27 : f32 to vector<8x384xf32>
    %83 = arith.mulf %82, %81 : vector<8x384xf32>
    %cst_28 = arith.constant 5.000000e-01 : f32
    %84 = vector.broadcast %cst_28 : f32 to vector<8x384xf32>
    %85 = arith.addf %83, %84 : vector<8x384xf32>
    %86 = vector.extract_strided_slice %85 {offsets = [0, 0], sizes = [8, 128], strides = [1, 1]} : vector<8x384xf32> to vector<8x128xf32>
    %87 = vector.extract_strided_slice %85 {offsets = [0, 128], sizes = [8, 128], strides = [1, 1]} : vector<8x384xf32> to vector<8x128xf32>
    %88 = vector.extract_strided_slice %85 {offsets = [0, 256], sizes = [8, 128], strides = [1, 1]} : vector<8x384xf32> to vector<8x128xf32>
    %89 = vector.extract_strided_slice %77 {offsets = [0, 384], sizes = [8, 128], strides = [1, 1]} : vector<8x512xf32> to vector<8x128xf32>
    %90 = math.tanh %89 : vector<8x128xf32>
    %91 = arith.mulf %71, %86 : vector<8x128xf32>
    %92 = arith.mulf %87, %90 : vector<8x128xf32>
    %93 = arith.addf %91, %92 : vector<8x128xf32>
    %94 = math.tanh %93 : vector<8x128xf32>
    %95 = arith.mulf %88, %94 : vector<8x128xf32>
    %c24 = arith.constant 24 : index
    %c0_29 = arith.constant 0 : index
    %96 = vector.load %arg7[%c24, %c0_29] : memref<64x128xf32, #tpu.memory_space<vmem>>, vector<8x128xf32>
    tpu.vector_store %arg7[%c24, %c0_29], %95 {strides = array<i32>} : memref<64x128xf32, #tpu.memory_space<vmem>>, vector<8x128xf32>,
    %97 = vector.extract_strided_slice %5 {offsets = [32, 0], sizes = [8, 512], strides = [1, 1]} : vector<64x512xf32> to vector<8x512xf32>
    %cst_30 = arith.constant dense<0.000000e+00> : vector<8x512xf32>
    %98 = tpu.matmul %95, %6, %cst_30 {dimension_numbers = #tpu.dot_dimension_numbers<[1], [0], [0], [1], [0, 0, 1, 1], [], []>} : vector<8x128xf32>, vector<128x512xf32>, vector<8x512xf32> -> vector<8x512xf32>
    %99 = arith.addf %97, %98 : vector<8x512xf32>
    %100 = vector.extract_strided_slice %99 {offsets = [0, 0], sizes = [8, 384], strides = [1, 1]} : vector<8x512xf32> to vector<8x384xf32>
    %cst_31 = arith.constant 5.000000e-01 : f32
    %101 = vector.broadcast %cst_31 : f32 to vector<8x384xf32>
    %102 = arith.mulf %101, %100 : vector<8x384xf32>
    %103 = math.tanh %102 : vector<8x384xf32>
    %cst_32 = arith.constant 5.000000e-01 : f32
    %104 = vector.broadcast %cst_32 : f32 to vector<8x384xf32>
    %105 = arith.mulf %104, %103 : vector<8x384xf32>
    %cst_33 = arith.constant 5.000000e-01 : f32
    %106 = vector.broadcast %cst_33 : f32 to vector<8x384xf32>
    %107 = arith.addf %105, %106 : vector<8x384xf32>
    %108 = vector.extract_strided_slice %107 {offsets = [0, 0], sizes = [8, 128], strides = [1, 1]} : vector<8x384xf32> to vector<8x128xf32>
    %109 = vector.extract_strided_slice %107 {offsets = [0, 128], sizes = [8, 128], strides = [1, 1]} : vector<8x384xf32> to vector<8x128xf32>
    %110 = vector.extract_strided_slice %107 {offsets = [0, 256], sizes = [8, 128], strides = [1, 1]} : vector<8x384xf32> to vector<8x128xf32>
    %111 = vector.extract_strided_slice %99 {offsets = [0, 384], sizes = [8, 128], strides = [1, 1]} : vector<8x512xf32> to vector<8x128xf32>
    %112 = math.tanh %111 : vector<8x128xf32>
    %113 = arith.mulf %93, %108 : vector<8x128xf32>
    %114 = arith.mulf %109, %112 : vector<8x128xf32>
    %115 = arith.addf %113, %114 : vector<8x128xf32>
    %116 = math.tanh %115 : vector<8x128xf32>
    %117 = arith.mulf %110, %116 : vector<8x128xf32>
    %c32 = arith.constant 32 : index
    %c0_34 = arith.constant 0 : index
    %118 = vector.load %arg7[%c32, %c0_34] : memref<64x128xf32, #tpu.memory_space<vmem>>, vector<8x128xf32>
    tpu.vector_store %arg7[%c32, %c0_34], %117 {strides = array<i32>} : memref<64x128xf32, #tpu.memory_space<vmem>>, vector<8x128xf32>,
    %119 = vector.extract_strided_slice %5 {offsets = [40, 0], sizes = [8, 512], strides = [1, 1]} : vector<64x512xf32> to vector<8x512xf32>
    %cst_35 = arith.constant dense<0.000000e+00> : vector<8x512xf32>
    %120 = tpu.matmul %117, %6, %cst_35 {dimension_numbers = #tpu.dot_dimension_numbers<[1], [0], [0], [1], [0, 0, 1, 1], [], []>} : vector<8x128xf32>, vector<128x512xf32>, vector<8x512xf32> -> vector<8x512xf32>
    %121 = arith.addf %119, %120 : vector<8x512xf32>
    %122 = vector.extract_strided_slice %121 {offsets = [0, 0], sizes = [8, 384], strides = [1, 1]} : vector<8x512xf32> to vector<8x384xf32>
    %cst_36 = arith.constant 5.000000e-01 : f32
    %123 = vector.broadcast %cst_36 : f32 to vector<8x384xf32>
    %124 = arith.mulf %123, %122 : vector<8x384xf32>
    %125 = math.tanh %124 : vector<8x384xf32>
    %cst_37 = arith.constant 5.000000e-01 : f32
    %126 = vector.broadcast %cst_37 : f32 to vector<8x384xf32>
    %127 = arith.mulf %126, %125 : vector<8x384xf32>
    %cst_38 = arith.constant 5.000000e-01 : f32
    %128 = vector.broadcast %cst_38 : f32 to vector<8x384xf32>
    %129 = arith.addf %127, %128 : vector<8x384xf32>
    %130 = vector.extract_strided_slice %129 {offsets = [0, 0], sizes = [8, 128], strides = [1, 1]} : vector<8x384xf32> to vector<8x128xf32>
    %131 = vector.extract_strided_slice %129 {offsets = [0, 128], sizes = [8, 128], strides = [1, 1]} : vector<8x384xf32> to vector<8x128xf32>
    %132 = vector.extract_strided_slice %129 {offsets = [0, 256], sizes = [8, 128], strides = [1, 1]} : vector<8x384xf32> to vector<8x128xf32>
    %133 = vector.extract_strided_slice %121 {offsets = [0, 384], sizes = [8, 128], strides = [1, 1]} : vector<8x512xf32> to vector<8x128xf32>
    %134 = math.tanh %133 : vector<8x128xf32>
    %135 = arith.mulf %115, %130 : vector<8x128xf32>
    %136 = arith.mulf %131, %134 : vector<8x128xf32>
    %137 = arith.addf %135, %136 : vector<8x128xf32>
    %138 = math.tanh %137 : vector<8x128xf32>
    %139 = arith.mulf %132, %138 : vector<8x128xf32>
    %c40 = arith.constant 40 : index
    %c0_39 = arith.constant 0 : index
    %140 = vector.load %arg7[%c40, %c0_39] : memref<64x128xf32, #tpu.memory_space<vmem>>, vector<8x128xf32>
    tpu.vector_store %arg7[%c40, %c0_39], %139 {strides = array<i32>} : memref<64x128xf32, #tpu.memory_space<vmem>>, vector<8x128xf32>,
    %141 = vector.extract_strided_slice %5 {offsets = [48, 0], sizes = [8, 512], strides = [1, 1]} : vector<64x512xf32> to vector<8x512xf32>
    %cst_40 = arith.constant dense<0.000000e+00> : vector<8x512xf32>
    %142 = tpu.matmul %139, %6, %cst_40 {dimension_numbers = #tpu.dot_dimension_numbers<[1], [0], [0], [1], [0, 0, 1, 1], [], []>} : vector<8x128xf32>, vector<128x512xf32>, vector<8x512xf32> -> vector<8x512xf32>
    %143 = arith.addf %141, %142 : vector<8x512xf32>
    %144 = vector.extract_strided_slice %143 {offsets = [0, 0], sizes = [8, 384], strides = [1, 1]} : vector<8x512xf32> to vector<8x384xf32>
    %cst_41 = arith.constant 5.000000e-01 : f32
    %145 = vector.broadcast %cst_41 : f32 to vector<8x384xf32>
    %146 = arith.mulf %145, %144 : vector<8x384xf32>
    %147 = math.tanh %146 : vector<8x384xf32>
    %cst_42 = arith.constant 5.000000e-01 : f32
    %148 = vector.broadcast %cst_42 : f32 to vector<8x384xf32>
    %149 = arith.mulf %148, %147 : vector<8x384xf32>
    %cst_43 = arith.constant 5.000000e-01 : f32
    %150 = vector.broadcast %cst_43 : f32 to vector<8x384xf32>
    %151 = arith.addf %149, %150 : vector<8x384xf32>
    %152 = vector.extract_strided_slice %151 {offsets = [0, 0], sizes = [8, 128], strides = [1, 1]} : vector<8x384xf32> to vector<8x128xf32>
    %153 = vector.extract_strided_slice %151 {offsets = [0, 128], sizes = [8, 128], strides = [1, 1]} : vector<8x384xf32> to vector<8x128xf32>
    %154 = vector.extract_strided_slice %151 {offsets = [0, 256], sizes = [8, 128], strides = [1, 1]} : vector<8x384xf32> to vector<8x128xf32>
    %155 = vector.extract_strided_slice %143 {offsets = [0, 384], sizes = [8, 128], strides = [1, 1]} : vector<8x512xf32> to vector<8x128xf32>
    %156 = math.tanh %155 : vector<8x128xf32>
    %157 = arith.mulf %137, %152 : vector<8x128xf32>
    %158 = arith.mulf %153, %156 : vector<8x128xf32>
    %159 = arith.addf %157, %158 : vector<8x128xf32>
    %160 = math.tanh %159 : vector<8x128xf32>
    %161 = arith.mulf %154, %160 : vector<8x128xf32>
    %c48 = arith.constant 48 : index
    %c0_44 = arith.constant 0 : index
    %162 = vector.load %arg7[%c48, %c0_44] : memref<64x128xf32, #tpu.memory_space<vmem>>, vector<8x128xf32>
    tpu.vector_store %arg7[%c48, %c0_44], %161 {strides = array<i32>} : memref<64x128xf32, #tpu.memory_space<vmem>>, vector<8x128xf32>,
    %163 = vector.extract_strided_slice %5 {offsets = [56, 0], sizes = [8, 512], strides = [1, 1]} : vector<64x512xf32> to vector<8x512xf32>
    %cst_45 = arith.constant dense<0.000000e+00> : vector<8x512xf32>
    %164 = tpu.matmul %161, %6, %cst_45 {dimension_numbers = #tpu.dot_dimension_numbers<[1], [0], [0], [1], [0, 0, 1, 1], [], []>} : vector<8x128xf32>, vector<128x512xf32>, vector<8x512xf32> -> vector<8x512xf32>
    %165 = arith.addf %163, %164 : vector<8x512xf32>
    %166 = vector.extract_strided_slice %165 {offsets = [0, 0], sizes = [8, 384], strides = [1, 1]} : vector<8x512xf32> to vector<8x384xf32>
    %cst_46 = arith.constant 5.000000e-01 : f32
    %167 = vector.broadcast %cst_46 : f32 to vector<8x384xf32>
    %168 = arith.mulf %167, %166 : vector<8x384xf32>
    %169 = math.tanh %168 : vector<8x384xf32>
    %cst_47 = arith.constant 5.000000e-01 : f32
    %170 = vector.broadcast %cst_47 : f32 to vector<8x384xf32>
    %171 = arith.mulf %170, %169 : vector<8x384xf32>
    %cst_48 = arith.constant 5.000000e-01 : f32
    %172 = vector.broadcast %cst_48 : f32 to vector<8x384xf32>
    %173 = arith.addf %171, %172 : vector<8x384xf32>
    %174 = vector.extract_strided_slice %173 {offsets = [0, 0], sizes = [8, 128], strides = [1, 1]} : vector<8x384xf32> to vector<8x128xf32>
    %175 = vector.extract_strided_slice %173 {offsets = [0, 128], sizes = [8, 128], strides = [1, 1]} : vector<8x384xf32> to vector<8x128xf32>
    %176 = vector.extract_strided_slice %173 {offsets = [0, 256], sizes = [8, 128], strides = [1, 1]} : vector<8x384xf32> to vector<8x128xf32>
    %177 = vector.extract_strided_slice %165 {offsets = [0, 384], sizes = [8, 128], strides = [1, 1]} : vector<8x512xf32> to vector<8x128xf32>
    %178 = math.tanh %177 : vector<8x128xf32>
    %179 = arith.mulf %159, %174 : vector<8x128xf32>
    %180 = arith.mulf %175, %178 : vector<8x128xf32>
    %181 = arith.addf %179, %180 : vector<8x128xf32>
    %182 = math.tanh %181 : vector<8x128xf32>
    %183 = arith.mulf %176, %182 : vector<8x128xf32>
    %c56 = arith.constant 56 : index
    %c0_49 = arith.constant 0 : index
    %184 = vector.load %arg7[%c56, %c0_49] : memref<64x128xf32, #tpu.memory_space<vmem>>, vector<8x128xf32>
    tpu.vector_store %arg7[%c56, %c0_49], %183 {strides = array<i32>} : memref<64x128xf32, #tpu.memory_space<vmem>>, vector<8x128xf32>,
    %c0_50 = arith.constant 0 : index
    %c0_51 = arith.constant 0 : index
    %185 = vector.load %arg5[%c0_50, %c0_51] : memref<128x128xf32, #tpu.memory_space<vmem>>, vector<128x128xf32>
    %cst_52 = arith.constant dense<0.000000e+00> : vector<8x128xf32>
    %186 = tpu.matmul %183, %185, %cst_52 {dimension_numbers = #tpu.dot_dimension_numbers<[1], [0], [0], [1], [0, 0, 1, 1], [], []>} : vector<8x128xf32>, vector<128x128xf32>, vector<8x128xf32> -> vector<8x128xf32>
    %c0_53 = arith.constant 0 : index
    %c0_54 = arith.constant 0 : index
    %187 = vector.load %arg6[%c0_53, %c0_54] : memref<1x128xf32, #tpu.memory_space<vmem>>, vector<1x128xf32>
    %188 = vector.broadcast %187 : vector<1x128xf32> to vector<8x128xf32>
    %189 = arith.addf %186, %188 : vector<8x128xf32>
    %c0_55 = arith.constant 0 : index
    %c0_56 = arith.constant 0 : index
    %190 = vector.load %arg8[%c0_55, %c0_56] : memref<8x128xf32, #tpu.memory_space<vmem>>, vector<8x128xf32>
    tpu.vector_store %arg8[%c0_55, %c0_56], %189 {strides = array<i32>} : memref<8x128xf32, #tpu.memory_space<vmem>>, vector<8x128xf32>,
    return
  }
  func.func @transform_0(%arg0: i32) -> (i32, i32) {
    %c0_i32 = arith.constant 0 : i32
    %c0_i32_0 = arith.constant 0 : i32
    %c0_i32_1 = arith.constant 0 : i32
    return %c0_i32, %c0_i32_0 : i32, i32
  }
  func.func @transform_1(%arg0: i32) -> (i32, i32) {
    %c0_i32 = arith.constant 0 : i32
    %c0_i32_0 = arith.constant 0 : i32
    %c0_i32_1 = arith.constant 0 : i32
    return %c0_i32, %c0_i32_0 : i32, i32
  }
  func.func @transform_2(%arg0: i32) -> (i32, i32) {
    %c0_i32 = arith.constant 0 : i32
    %c0_i32_0 = arith.constant 0 : i32
    %c0_i32_1 = arith.constant 0 : i32
    return %c0_i32, %c0_i32_0 : i32, i32
  }
  func.func @transform_3(%arg0: i32) -> (i32, i32) {
    %c0_i32 = arith.constant 0 : i32
    %c0_i32_0 = arith.constant 0 : i32
    %c0_i32_1 = arith.constant 0 : i32
    return %c0_i32, %c0_i32_0 : i32, i32
  }
  func.func @transform_4(%arg0: i32) -> (i32, i32) {
    %c0_i32 = arith.constant 0 : i32
    %c0_i32_0 = arith.constant 0 : i32
    %c0_i32_1 = arith.constant 0 : i32
    return %c0_i32, %c0_i32_0 : i32, i32
  }
  func.func @transform_5(%arg0: i32) -> (i32, i32) {
    %c0_i32 = arith.constant 0 : i32
    %c0_i32_0 = arith.constant 0 : i32
    %c0_i32_1 = arith.constant 0 : i32
    return %c0_i32, %c0_i32_0 : i32, i32
  }
  func.func @transform_6(%arg0: i32) -> (i32, i32) {
    %c0_i32 = arith.constant 0 : i32
    %c0_i32_0 = arith.constant 0 : i32
    %c0_i32_1 = arith.constant 0 : i32
    return %c0_i32, %c0_i32_0 : i32, i32
  }
  func.func @transform_7(%arg0: i32) -> (i32, i32) {
    %c0_i32 = arith.constant 0 : i32
    %c0_i32_0 = arith.constant 0 : i32
    %c0_i32_1 = arith.constant 0 : i32
    return %c0_i32, %c0_i32_0 : i32, i32
  }
}

</mosaic_0001>

<llo_original>
// kernel: tpu_custom_call.1
$region0: #{tpu_custom_call.1}
  #allocation0 [shape = 'u32[]', space=smem, size = 0x4, offset = 0x4, fixed_abs, tag = 'smem constant byte address 0x4 - core index']
  #allocation1 [shape = 'u32[72,128]{1,0:T(1,128)}', space=vmem, size = 0x9000, scoped, tag = 'internal scratch']
  %s0 = inlined_call_operand.vmem [shape: f32[64,28], index: 0, kind: input, shape index: {}]
  %s1 = inlined_call_operand.hbm [shape: f32[28,512], index: 1, kind: input, shape index: {}]
  %s2 = inlined_call_operand.hbm [shape: f32[128,512], index: 2, kind: input, shape index: {}]
  %s3 = inlined_call_operand.vmem [shape: f32[1,512], index: 3, kind: input, shape index: {}]
  %s4 = inlined_call_operand.hbm [shape: f32[128,128], index: 4, kind: input, shape index: {}]
  %s5 = inlined_call_operand.vmem [shape: f32[1,128], index: 5, kind: input, shape index: {}]
  %s6 = inlined_call_operand.hbm [shape: f32[64,128], index: 6, kind: output, shape index: {0}]
  %s7 = inlined_call_operand.hbm [shape: f32[8,128], index: 7, kind: output, shape index: {1}]
  %8 = xla_tuple %s6, %s7
  %s9 = sld [smem:[#allocation0]]
  $region54: #{tpu_custom_call.1} parent=0
    _
  %s11 = ssub.s32 1, %s9
  %s12 = scalar_select 0, %s11, %s9
  $region1: #{tpu_custom_call.1} parent=0
    #allocation2 [shape = 'u8[65536]{0}', space=vmem, size = 0x10000, scoped, tag = 'input window, operand 1, single buffered']
    #allocation3 [shape = 's32[1]{0}', space=sflag, size = 0x4, scoped, tag = 'scoped memory for tpu_custom_call.1']
    #allocation4 [shape = 's32[1]{0}', space=sflag, size = 0x4, scoped, tag = 'scoped memory for tpu_custom_call.1']
    #allocation5 [shape = 'u8[262144]{0}', space=vmem, size = 0x40000, scoped, tag = 'input window, operand 2, single buffered']
    #allocation6 [shape = 's32[1]{0}', space=sflag, size = 0x4, scoped, tag = 'scoped memory for tpu_custom_call.1']
    #allocation7 [shape = 'u8[65536]{0}', space=vmem, size = 0x10000, scoped, tag = 'input window, operand 4, single buffered']
    #allocation8 [shape = 'u8[32768]{0}', space=vmem, size = 0x8000, scoped, tag = 'output window, operand 0, single buffered']
    #allocation9 [shape = 'u8[4096]{0}', space=vmem, size = 0x1000, scoped, tag = 'output window, operand 1, single buffered']
    #allocation10 [shape = 's32[1]{0}', space=sflag, size = 0x4, scoped, tag = 'scoped memory for tpu_custom_call.1']
    %13 = vsyncpa [#allocation3], 0
    %14 = vsyncpa [#allocation6], 0
    %15 = vsyncpa [#allocation4], 0
    %16 = vsyncpa [#allocation10], 0
    // Predicated region
    $region2: #{tpu_custom_call.1} parent=1 // pred_check
      _
    $region3: #{tpu_custom_call.1} parent=1 // pred_check_branch
      %18 = sbr.rel (0) target = $region5
    $region4: #{tpu_custom_call.1} parent=1 // pred_region
      _
    $region5: #{tpu_custom_call.1} parent=1 // pred_fallthru
      _
    // Predicated region
    $region6: #{tpu_custom_call.1} parent=1 // pred_check
      _
    $region7: #{tpu_custom_call.1} parent=1 // pred_check_branch
      %20 = sbr.rel (0) target = $region9
    $region8: #{tpu_custom_call.1} parent=1 // pred_region
      %22 = vsyncadd [#allocation3], 0
      %s23 = sshll.u32 %s1, 4
      %s24 = int_to_ptr.hbm [resolvable:$true] %s23
      %s25 = sshll.u32 [#allocation2], 4
      %s26 = int_to_ptr.vmem [resolvable:$true] %s25
      %31 = dma.hbm_to_vmem [thread:$0]  %s24, 2048, %s26, [#allocation3], 512, 512, 32
    $region9: #{tpu_custom_call.1} parent=1 // pred_fallthru
      _
    // Predicated region
    $region10: #{tpu_custom_call.1} parent=1 // pred_check
      _
    $region11: #{tpu_custom_call.1} parent=1 // pred_check_branch
      %33 = sbr.rel (0) target = $region13
    $region12: #{tpu_custom_call.1} parent=1 // pred_region
      %35 = vsyncadd [#allocation6], 0
      %s36 = sshll.u32 %s2, 4
      %s37 = int_to_ptr.hbm [resolvable:$true] %s36
      %s38 = sshll.u32 [#allocation5], 4
      %s39 = int_to_ptr.vmem [resolvable:$true] %s38
      %44 = dma.hbm_to_vmem [thread:$0]  %s37, 8192, %s39, [#allocation6], 512, 512, 32
    $region13: #{tpu_custom_call.1} parent=1 // pred_fallthru
      _
    // Predicated region
    $region14: #{tpu_custom_call.1} parent=1 // pred_check
      _
    $region15: #{tpu_custom_call.1} parent=1 // pred_check_branch
      %46 = sbr.rel (0) target = $region17
    $region16: #{tpu_custom_call.1} parent=1 // pred_region
      _
    $region17: #{tpu_custom_call.1} parent=1 // pred_fallthru
      _
    // Predicated region
    $region18: #{tpu_custom_call.1} parent=1 // pred_check
      _
    $region19: #{tpu_custom_call.1} parent=1 // pred_check_branch
      %48 = sbr.rel (0) target = $region21
    $region20: #{tpu_custom_call.1} parent=1 // pred_region
      %50 = vsyncadd [#allocation6], 0
      %s51 = sshll.u32 %s4, 4
      %s52 = int_to_ptr.hbm [resolvable:$true] %s51
      %s53 = sshll.u32 [#allocation7], 4
      %s54 = int_to_ptr.vmem [resolvable:$true] %s53
      %59 = dma.hbm_to_vmem [thread:$0]  %s52, 2048, %s54, [#allocation6], 128, 128, 8
    $region21: #{tpu_custom_call.1} parent=1 // pred_fallthru
      _
    // Predicated region
    $region22: #{tpu_custom_call.1} parent=1 // pred_check
      _
    $region23: #{tpu_custom_call.1} parent=1 // pred_check_branch
      %61 = sbr.rel (0) target = $region25
    $region24: #{tpu_custom_call.1} parent=1 // pred_region
      _
    $region25: #{tpu_custom_call.1} parent=1 // pred_fallthru
      _
    // Predicated region
    $region26: #{tpu_custom_call.1} parent=1 // pred_check
      _
    $region27: #{tpu_custom_call.1} parent=1 // pred_check_branch
      %63 = sbr.rel (0) target = $region29
    $region28: #{tpu_custom_call.1} parent=1 // pred_region
      %65 = dma.done [#allocation3], 2048
    $region29: #{tpu_custom_call.1} parent=1 // pred_fallthru
      _
    // Predicated region
    $region30: #{tpu_custom_call.1} parent=1 // pred_check
      _
    $region31: #{tpu_custom_call.1} parent=1 // pred_check_branch
      %67 = sbr.rel (0) target = $region33
    $region32: #{tpu_custom_call.1} parent=1 // pred_region
      %69 = dma.done [#allocation6], 8192
    $region33: #{tpu_custom_call.1} parent=1 // pred_fallthru
      _
    // Predicated region
    $region34: #{tpu_custom_call.1} parent=1 // pred_check
      _
    $region35: #{tpu_custom_call.1} parent=1 // pred_check_branch
      %71 = sbr.rel (0) target = $region37
    $region36: #{tpu_custom_call.1} parent=1 // pred_region
      %73 = dma.done [#allocation6], 2048
    $region37: #{tpu_custom_call.1} parent=1 // pred_fallthru
      _
    %v74 = vld [vmem:[%s0] sm:$0xff]
    %v75 = vld [vmem:[%s0 + $0x8] sm:$0xff]
    %v76 = vld [vmem:[%s0 + $0x10] sm:$0xff]
    %v77 = vld [vmem:[%s0 + $0x18] sm:$0xff]
    %v78 = vld [vmem:[%s0 + $0x20] sm:$0xff]
    %v79 = vld [vmem:[%s0 + $0x28] sm:$0xff]
    %v80 = vld [vmem:[%s0 + $0x30] sm:$0xff]
    %v81 = vld [vmem:[%s0 + $0x38] sm:$0xff]
    %v82 = vld [vmem:[#allocation2] sm:$0xff]
    %v83 = vld [vmem:[#allocation2 + $0x8] sm:$0xff]
    %v84 = vld [vmem:[#allocation2 + $0x10] sm:$0xff]
    %v85 = vld [vmem:[#allocation2 + $0x18] sm:$0xff]
    %v86 = vld [vmem:[#allocation2 + $0x20] sm:$0xff]
    %v87 = vld [vmem:[#allocation2 + $0x28] sm:$0xff]
    %v88 = vld [vmem:[#allocation2 + $0x30] sm:$0xff]
    %v89 = vld [vmem:[#allocation2 + $0x38] sm:$0xff]
    %v90 = vld [vmem:[#allocation2 + $0x40] sm:$0xff]
    %v91 = vld [vmem:[#allocation2 + $0x48] sm:$0xff]
    %v92 = vld [vmem:[#allocation2 + $0x50] sm:$0xff]
    %v93 = vld [vmem:[#allocation2 + $0x58] sm:$0xff]
    %v94 = vld [vmem:[#allocation2 + $0x60] sm:$0xf]
    %v95 = vld [vmem:[#allocation2 + $0x68] sm:$0xf]
    %v96 = vld [vmem:[#allocation2 + $0x70] sm:$0xf]
    %v97 = vld [vmem:[#allocation2 + $0x78] sm:$0xf]
    %v98 = vld [vmem:[%s3] sm:$0xf]
    %v100 = vperm.slane %v98, 0
    %v101 = vperm.slane %v98, 1
    %v102 = vperm.slane %v98, 2
    %v103 = vperm.slane %v98, 3
    %vm108 = vcmask 228352
    %v110 = vsel %vm108, %v74, 0
    %v113 = vsel %vm108, %v75, 0
    %v116 = vsel %vm108, %v76, 0
    %v119 = vsel %vm108, %v77, 0
    %v122 = vsel %vm108, %v78, 0
    %v125 = vsel %vm108, %v79, 0
    %v128 = vsel %vm108, %v80, 0
    %v131 = vsel %vm108, %v81, 0
    %vm133 = vcmask 1043456
    %v135 = vsel %vm133, %v94, 0
    %v138 = vsel %vm133, %v95, 0
    %v141 = vsel %vm133, %v96, 0
    %v144 = vsel %vm133, %v97, 0
    %146 = vmatpush.msra.mxu0 0.0
    %147 = vmatpush.msra.mxu0 0.0
    %148 = vmatpush.msra.mxu0 0.0
    %149 = vmatpush.msra.mxu0 0.0
    %150 = vmatpush.msra.mxu0 0.0
    %151 = vmatpush.msra.mxu0 0.0
    %152 = vmatpush.msra.mxu0 0.0
    %153 = vmatpush.msra.mxu0 0.0
    %154 = vmatpush.msra.mxu0 0.0
    %155 = vmatpush.msra.mxu0 0.0
    %156 = vmatpush.msra.mxu0 0.0
    %157 = vmatpush.msra.mxu0 0.0
    %158 = vmatpush.msra.mxu0 %v135
    %159 = vmatpush.msra.mxu0 %v90
    %160 = vmatpush.msra.mxu0 %v86
    %161 = vmatpush.msra.mxu0 %v82
    %162 = vmatmul.f32.gmra.mxu0 %v110
    %v163 = vpop.f32.mrf.mxu0
    %v164 = vadd.f32 %v100, %v163
    %165 = vmatmul.f32.gmra.mxu0 %v113
    %v166 = vpop.f32.mrf.mxu0
    %v167 = vadd.f32 %v100, %v166
    %168 = vmatmul.f32.gmra.mxu0 %v116
    %v169 = vpop.f32.mrf.mxu0
    %v170 = vadd.f32 %v100, %v169
    %171 = vmatmul.f32.gmra.mxu0 %v119
    %v172 = vpop.f32.mrf.mxu0
    %v173 = vadd.f32 %v100, %v172
    %174 = vmatmul.f32.gmra.mxu0 %v122
    %v175 = vpop.f32.mrf.mxu0
    %v176 = vadd.f32 %v100, %v175
    %177 = vmatmul.f32.gmra.mxu0 %v125
    %v178 = vpop.f32.mrf.mxu0
    %v179 = vadd.f32 %v100, %v178
    %180 = vmatmul.f32.gmra.mxu0 %v128
    %v181 = vpop.f32.mrf.mxu0
    %v182 = vadd.f32 %v100, %v181
    %183 = vmatmul.f32.gmra.mxu0 %v131
    %v184 = vpop.f32.mrf.mxu0
    %v185 = vadd.f32 %v100, %v184
    %186 = vdwg.mxu0
    %187 = vmatpush.msra.mxu0 0.0
    %188 = vmatpush.msra.mxu0 0.0
    %189 = vmatpush.msra.mxu0 0.0
    %190 = vmatpush.msra.mxu0 0.0
    %191 = vmatpush.msra.mxu0 0.0
    %192 = vmatpush.msra.mxu0 0.0
    %193 = vmatpush.msra.mxu0 0.0
    %194 = vmatpush.msra.mxu0 0.0
    %195 = vmatpush.msra.mxu0 0.0
    %196 = vmatpush.msra.mxu0 0.0
    %197 = vmatpush.msra.mxu0 0.0
    %198 = vmatpush.msra.mxu0 0.0
    %199 = vmatpush.msra.mxu0 %v138
    %200 = vmatpush.msra.mxu0 %v91
    %201 = vmatpush.msra.mxu0 %v87
    %202 = vmatpush.msra.mxu0 %v83
    %203 = vmatmul.f32.gmra.mxu0 %v110
    %v204 = vpop.f32.mrf.mxu0
    %v205 = vadd.f32 %v101, %v204
    %206 = vmatmul.f32.gmra.mxu0 %v113
    %v207 = vpop.f32.mrf.mxu0
    %v208 = vadd.f32 %v101, %v207
    %209 = vmatmul.f32.gmra.mxu0 %v116
    %v210 = vpop.f32.mrf.mxu0
    %v211 = vadd.f32 %v101, %v210
    %212 = vmatmul.f32.gmra.mxu0 %v119
    %v213 = vpop.f32.mrf.mxu0
    %v214 = vadd.f32 %v101, %v213
    %215 = vmatmul.f32.gmra.mxu0 %v122
    %v216 = vpop.f32.mrf.mxu0
    %v217 = vadd.f32 %v101, %v216
    %218 = vmatmul.f32.gmra.mxu0 %v125
    %v219 = vpop.f32.mrf.mxu0
    %v220 = vadd.f32 %v101, %v219
    %221 = vmatmul.f32.gmra.mxu0 %v128
    %v222 = vpop.f32.mrf.mxu0
    %v223 = vadd.f32 %v101, %v222
    %224 = vmatmul.f32.gmra.mxu0 %v131
    %v225 = vpop.f32.mrf.mxu0
    %v226 = vadd.f32 %v101, %v225
    %227 = vdwg.mxu0
    %228 = vmatpush.msra.mxu0 0.0
    %229 = vmatpush.msra.mxu0 0.0
    %230 = vmatpush.msra.mxu0 0.0
    %231 = vmatpush.msra.mxu0 0.0
    %232 = vmatpush.msra.mxu0 0.0
    %233 = vmatpush.msra.mxu0 0.0
    %234 = vmatpush.msra.mxu0 0.0
    %235 = vmatpush.msra.mxu0 0.0
    %236 = vmatpush.msra.mxu0 0.0
    %237 = vmatpush.msra.mxu0 0.0
    %238 = vmatpush.msra.mxu0 0.0
    %239 = vmatpush.msra.mxu0 0.0
    %240 = vmatpush.msra.mxu0 %v141
    %241 = vmatpush.msra.mxu0 %v92
    %242 = vmatpush.msra.mxu0 %v88
    %243 = vmatpush.msra.mxu0 %v84
    %244 = vmatmul.f32.gmra.mxu0 %v110
    %v245 = vpop.f32.mrf.mxu0
    %v246 = vadd.f32 %v102, %v245
    %247 = vmatmul.f32.gmra.mxu0 %v113
    %v248 = vpop.f32.mrf.mxu0
    %v249 = vadd.f32 %v102, %v248
    %250 = vmatmul.f32.gmra.mxu0 %v116
    %v251 = vpop.f32.mrf.mxu0
    %v252 = vadd.f32 %v102, %v251
    %253 = vmatmul.f32.gmra.mxu0 %v119
    %v254 = vpop.f32.mrf.mxu0
    %v255 = vadd.f32 %v102, %v254
    %256 = vmatmul.f32.gmra.mxu0 %v122
    %v257 = vpop.f32.mrf.mxu0
    %v258 = vadd.f32 %v102, %v257
    %259 = vmatmul.f32.gmra.mxu0 %v125
    %v260 = vpop.f32.mrf.mxu0
    %v261 = vadd.f32 %v102, %v260
    %262 = vmatmul.f32.gmra.mxu0 %v128
    %v263 = vpop.f32.mrf.mxu0
    %v264 = vadd.f32 %v102, %v263
    %265 = vmatmul.f32.gmra.mxu0 %v131
    %v266 = vpop.f32.mrf.mxu0
    %v267 = vadd.f32 %v102, %v266
    %268 = vdwg.mxu0
    %269 = vmatpush.msra.mxu0 0.0
    %270 = vmatpush.msra.mxu0 0.0
    %271 = vmatpush.msra.mxu0 0.0
    %272 = vmatpush.msra.mxu0 0.0
    %273 = vmatpush.msra.mxu0 0.0
    %274 = vmatpush.msra.mxu0 0.0
    %275 = vmatpush.msra.mxu0 0.0
    %276 = vmatpush.msra.mxu0 0.0
    %277 = vmatpush.msra.mxu0 0.0
    %278 = vmatpush.msra.mxu0 0.0
    %279 = vmatpush.msra.mxu0 0.0
    %280 = vmatpush.msra.mxu0 0.0
    %281 = vmatpush.msra.mxu0 %v144
    %282 = vmatpush.msra.mxu0 %v93
    %283 = vmatpush.msra.mxu0 %v89
    %284 = vmatpush.msra.mxu0 %v85
    %285 = vmatmul.f32.gmra.mxu0 %v110
    %v286 = vpop.f32.mrf.mxu0
    %v287 = vadd.f32 %v103, %v286
    %288 = vmatmul.f32.gmra.mxu0 %v113
    %v289 = vpop.f32.mrf.mxu0
    %v290 = vadd.f32 %v103, %v289
    %291 = vmatmul.f32.gmra.mxu0 %v116
    %v292 = vpop.f32.mrf.mxu0
    %v293 = vadd.f32 %v103, %v292
    %294 = vmatmul.f32.gmra.mxu0 %v119
    %v295 = vpop.f32.mrf.mxu0
    %v296 = vadd.f32 %v103, %v295
    %297 = vmatmul.f32.gmra.mxu0 %v122
    %v298 = vpop.f32.mrf.mxu0
    %v299 = vadd.f32 %v103, %v298
    %300 = vmatmul.f32.gmra.mxu0 %v125
    %v301 = vpop.f32.mrf.mxu0
    %v302 = vadd.f32 %v103, %v301
    %303 = vmatmul.f32.gmra.mxu0 %v128
    %v304 = vpop.f32.mrf.mxu0
    %v305 = vadd.f32 %v103, %v304
    %306 = vmatmul.f32.gmra.mxu0 %v131
    %v307 = vpop.f32.mrf.mxu0
    %v308 = vadd.f32 %v103, %v307
    %309 = vdwg.mxu0
    %v310 = vld [vmem:[#allocation5] sm:$0xff]
    %v311 = vld [vmem:[#allocation5 + $0x8] sm:$0xff]
    %v312 = vld [vmem:[#allocation5 + $0x10] sm:$0xff]
    %v313 = vld [vmem:[#allocation5 + $0x18] sm:$0xff]
    %v314 = vld [vmem:[#allocation5 + $0x20] sm:$0xff]
    %v315 = vld [vmem:[#allocation5 + $0x28] sm:$0xff]
    %v316 = vld [vmem:[#allocation5 + $0x30] sm:$0xff]
    %v317 = vld [vmem:[#allocation5 + $0x38] sm:$0xff]
    %v318 = vld [vmem:[#allocation5 + $0x40] sm:$0xff]
    %v319 = vld [vmem:[#allocation5 + $0x48] sm:$0xff]
    %v320 = vld [vmem:[#allocation5 + $0x50] sm:$0xff]
    %v321 = vld [vmem:[#allocation5 + $0x58] sm:$0xff]
    %v322 = vld [vmem:[#allocation5 + $0x60] sm:$0xff]
    %v323 = vld [vmem:[#allocation5 + $0x68] sm:$0xff]
    %v324 = vld [vmem:[#allocation5 + $0x70] sm:$0xff]
    %v325 = vld [vmem:[#allocation5 + $0x78] sm:$0xff]
    %v326 = vld [vmem:[#allocation5 + $0x80] sm:$0xff]
    %v327 = vld [vmem:[#allocation5 + $0x88] sm:$0xff]
    %v328 = vld [vmem:[#allocation5 + $0x90] sm:$0xff]
    %v329 = vld [vmem:[#allocation5 + $0x98] sm:$0xff]
    %v330 = vld [vmem:[#allocation5 + $0xa0] sm:$0xff]
    %v331 = vld [vmem:[#allocation5 + $0xa8] sm:$0xff]
    %v332 = vld [vmem:[#allocation5 + $0xb0] sm:$0xff]
    %v333 = vld [vmem:[#allocation5 + $0xb8] sm:$0xff]
    %v334 = vld [vmem:[#allocation5 + $0xc0] sm:$0xff]
    %v335 = vld [vmem:[#allocation5 + $0xc8] sm:$0xff]
    %v336 = vld [vmem:[#allocation5 + $0xd0] sm:$0xff]
    %v337 = vld [vmem:[#allocation5 + $0xd8] sm:$0xff]
    %v338 = vld [vmem:[#allocation5 + $0xe0] sm:$0xff]
    %v339 = vld [vmem:[#allocation5 + $0xe8] sm:$0xff]
    %v340 = vld [vmem:[#allocation5 + $0xf0] sm:$0xff]
    %v341 = vld [vmem:[#allocation5 + $0xf8] sm:$0xff]
    %v342 = vld [vmem:[#allocation5 + $0x100] sm:$0xff]
    %v343 = vld [vmem:[#allocation5 + $0x108] sm:$0xff]
    %v344 = vld [vmem:[#allocation5 + $0x110] sm:$0xff]
    %v345 = vld [vmem:[#allocation5 + $0x118] sm:$0xff]
    %v346 = vld [vmem:[#allocation5 + $0x120] sm:$0xff]
    %v347 = vld [vmem:[#allocation5 + $0x128] sm:$0xff]
    %v348 = vld [vmem:[#allocation5 + $0x130] sm:$0xff]
    %v349 = vld [vmem:[#allocation5 + $0x138] sm:$0xff]
    %v350 = vld [vmem:[#allocation5 + $0x140] sm:$0xff]
    %v351 = vld [vmem:[#allocation5 + $0x148] sm:$0xff]
    %v352 = vld [vmem:[#allocation5 + $0x150] sm:$0xff]
    %v353 = vld [vmem:[#allocation5 + $0x158] sm:$0xff]
    %v354 = vld [vmem:[#allocation5 + $0x160] sm:$0xff]
    %v355 = vld [vmem:[#allocation5 + $0x168] sm:$0xff]
    %v356 = vld [vmem:[#allocation5 + $0x170] sm:$0xff]
    %v357 = vld [vmem:[#allocation5 + $0x178] sm:$0xff]
    %v358 = vld [vmem:[#allocation5 + $0x180] sm:$0xff]
    %v359 = vld [vmem:[#allocation5 + $0x188] sm:$0xff]
    %v360 = vld [vmem:[#allocation5 + $0x190] sm:$0xff]
    %v361 = vld [vmem:[#allocation5 + $0x198] sm:$0xff]
    %v362 = vld [vmem:[#allocation5 + $0x1a0] sm:$0xff]
    %v363 = vld [vmem:[#allocation5 + $0x1a8] sm:$0xff]
    %v364 = vld [vmem:[#allocation5 + $0x1b0] sm:$0xff]
    %v365 = vld [vmem:[#allocation5 + $0x1b8] sm:$0xff]
    %v366 = vld [vmem:[#allocation5 + $0x1c0] sm:$0xff]
    %v367 = vld [vmem:[#allocation5 + $0x1c8] sm:$0xff]
    %v368 = vld [vmem:[#allocation5 + $0x1d0] sm:$0xff]
    %v369 = vld [vmem:[#allocation5 + $0x1d8] sm:$0xff]
    %v370 = vld [vmem:[#allocation5 + $0x1e0] sm:$0xff]
    %v371 = vld [vmem:[#allocation5 + $0x1e8] sm:$0xff]
    %v372 = vld [vmem:[#allocation5 + $0x1f0] sm:$0xff]
    %v373 = vld [vmem:[#allocation5 + $0x1f8] sm:$0xff]
    %374 = vmatpush.msra.mxu0 %v370
    %375 = vmatpush.msra.mxu0 %v366
    %376 = vmatpush.msra.mxu0 %v362
    %377 = vmatpush.msra.mxu0 %v358
    %378 = vmatpush.msra.mxu0 %v354
    %379 = vmatpush.msra.mxu0 %v350
    %380 = vmatpush.msra.mxu0 %v346
    %381 = vmatpush.msra.mxu0 %v342
    %382 = vmatpush.msra.mxu0 %v338
    %383 = vmatpush.msra.mxu0 %v334
    %384 = vmatpush.msra.mxu0 %v330
    %385 = vmatpush.msra.mxu0 %v326
    %386 = vmatpush.msra.mxu0 %v322
    %387 = vmatpush.msra.mxu0 %v318
    %388 = vmatpush.msra.mxu0 %v314
    %389 = vmatpush.msra.mxu0 %v310
    %390 = vmatmul.f32.gmra.mxu0 0.0
    %v391 = vpop.f32.mrf.mxu0
    %v392 = vadd.f32 0.0, %v391
    %393 = vdwg.mxu0
    %394 = vmatpush.msra.mxu0 %v371
    %395 = vmatpush.msra.mxu0 %v367
    %396 = vmatpush.msra.mxu0 %v363
    %397 = vmatpush.msra.mxu0 %v359
    %398 = vmatpush.msra.mxu0 %v355
    %399 = vmatpush.msra.mxu0 %v351
    %400 = vmatpush.msra.mxu0 %v347
    %401 = vmatpush.msra.mxu0 %v343
    %402 = vmatpush.msra.mxu0 %v339
    %403 = vmatpush.msra.mxu0 %v335
    %404 = vmatpush.msra.mxu0 %v331
    %405 = vmatpush.msra.mxu0 %v327
    %406 = vmatpush.msra.mxu0 %v323
    %407 = vmatpush.msra.mxu0 %v319
    %408 = vmatpush.msra.mxu0 %v315
    %409 = vmatpush.msra.mxu0 %v311
    %410 = vmatmul.f32.gmra.mxu0 0.0
    %v411 = vpop.f32.mrf.mxu0
    %v412 = vadd.f32 0.0, %v411
    %413 = vdwg.mxu0
    %414 = vmatpush.msra.mxu0 %v372
    %415 = vmatpush.msra.mxu0 %v368
    %416 = vmatpush.msra.mxu0 %v364
    %417 = vmatpush.msra.mxu0 %v360
    %418 = vmatpush.msra.mxu0 %v356
    %419 = vmatpush.msra.mxu0 %v352
    %420 = vmatpush.msra.mxu0 %v348
    %421 = vmatpush.msra.mxu0 %v344
    %422 = vmatpush.msra.mxu0 %v340
    %423 = vmatpush.msra.mxu0 %v336
    %424 = vmatpush.msra.mxu0 %v332
    %425 = vmatpush.msra.mxu0 %v328
    %426 = vmatpush.msra.mxu0 %v324
    %427 = vmatpush.msra.mxu0 %v320
    %428 = vmatpush.msra.mxu0 %v316
    %429 = vmatpush.msra.mxu0 %v312
    %430 = vmatmul.f32.gmra.mxu0 0.0
    %v431 = vpop.f32.mrf.mxu0
    %v432 = vadd.f32 0.0, %v431
    %433 = vdwg.mxu0
    %434 = vmatpush.msra.mxu0 %v373
    %435 = vmatpush.msra.mxu0 %v369
    %436 = vmatpush.msra.mxu0 %v365
    %437 = vmatpush.msra.mxu0 %v361
    %438 = vmatpush.msra.mxu0 %v357
    %439 = vmatpush.msra.mxu0 %v353
    %440 = vmatpush.msra.mxu0 %v349
    %441 = vmatpush.msra.mxu0 %v345
    %442 = vmatpush.msra.mxu0 %v341
    %443 = vmatpush.msra.mxu0 %v337
    %444 = vmatpush.msra.mxu0 %v333
    %445 = vmatpush.msra.mxu0 %v329
    %446 = vmatpush.msra.mxu0 %v325
    %447 = vmatpush.msra.mxu0 %v321
    %448 = vmatpush.msra.mxu0 %v317
    %449 = vmatpush.msra.mxu0 %v313
    %450 = vmatmul.f32.gmra.mxu0 0.0
    %v451 = vpop.f32.mrf.mxu0
    %v452 = vadd.f32 0.0, %v451
    %453 = vdwg.mxu0
    %v454 = vadd.f32 %v164, %v392
    %v455 = vadd.f32 %v205, %v412
    %v456 = vadd.f32 %v246, %v432
    %v457 = vadd.f32 %v287, %v452
    %v458 = vmul.f32 %v454, 0.5
    %v459 = vmul.f32 %v455, 0.5
    %v460 = vmul.f32 %v456, 0.5
    %v461 = vtanh.pop %v458
    %v462 = vtanh.pop %v459
    %v463 = vtanh.pop %v460
    %v464 = vmul.f32 %v461, 0.5
    %v465 = vmul.f32 %v462, 0.5
    %v466 = vmul.f32 %v463, 0.5
    %v467 = vadd.f32 %v464, 0.5
    %v468 = vadd.f32 %v465, 0.5
    %v469 = vadd.f32 %v466, 0.5
    %v470 = vtanh.pop %v457
    %v471 = vmul.f32 %v467, 0.0
    %v472 = vmul.f32 %v468, %v470
    %v473 = vadd.f32 %v471, %v472
    %v474 = vtanh.pop %v473
    %v475 = vmul.f32 %v469, %v474
    %476 = vst [vmem:[#allocation8] sm:$0xff] %v475
    %477 = vmatpush.msra.mxu0 %v370
    %478 = vmatpush.msra.mxu0 %v366
    %479 = vmatpush.msra.mxu0 %v362
    %480 = vmatpush.msra.mxu0 %v358
    %481 = vmatpush.msra.mxu0 %v354
    %482 = vmatpush.msra.mxu0 %v350
    %483 = vmatpush.msra.mxu0 %v346
    %484 = vmatpush.msra.mxu0 %v342
    %485 = vmatpush.msra.mxu0 %v338
    %486 = vmatpush.msra.mxu0 %v334
    %487 = vmatpush.msra.mxu0 %v330
    %488 = vmatpush.msra.mxu0 %v326
    %489 = vmatpush.msra.mxu0 %v322
    %490 = vmatpush.msra.mxu0 %v318
    %491 = vmatpush.msra.mxu0 %v314
    %492 = vmatpush.msra.mxu0 %v310
    %493 = vmatmul.f32.gmra.mxu0 %v475
    %v494 = vpop.f32.mrf.mxu0
    %v495 = vadd.f32 0.0, %v494
    %496 = vdwg.mxu0
    %497 = vmatpush.msra.mxu0 %v371
    %498 = vmatpush.msra.mxu0 %v367
    %499 = vmatpush.msra.mxu0 %v363
    %500 = vmatpush.msra.mxu0 %v359
    %501 = vmatpush.msra.mxu0 %v355
    %502 = vmatpush.msra.mxu0 %v351
    %503 = vmatpush.msra.mxu0 %v347
    %504 = vmatpush.msra.mxu0 %v343
    %505 = vmatpush.msra.mxu0 %v339
    %506 = vmatpush.msra.mxu0 %v335
    %507 = vmatpush.msra.mxu0 %v331
    %508 = vmatpush.msra.mxu0 %v327
    %509 = vmatpush.msra.mxu0 %v323
    %510 = vmatpush.msra.mxu0 %v319
    %511 = vmatpush.msra.mxu0 %v315
    %512 = vmatpush.msra.mxu0 %v311
    %513 = vmatmul.f32.gmra.mxu0 %v475
    %v514 = vpop.f32.mrf.mxu0
    %v515 = vadd.f32 0.0, %v514
    %516 = vdwg.mxu0
    %517 = vmatpush.msra.mxu0 %v372
    %518 = vmatpush.msra.mxu0 %v368
    %519 = vmatpush.msra.mxu0 %v364
    %520 = vmatpush.msra.mxu0 %v360
    %521 = vmatpush.msra.mxu0 %v356
    %522 = vmatpush.msra.mxu0 %v352
    %523 = vmatpush.msra.mxu0 %v348
    %524 = vmatpush.msra.mxu0 %v344
    %525 = vmatpush.msra.mxu0 %v340
    %526 = vmatpush.msra.mxu0 %v336
    %527 = vmatpush.msra.mxu0 %v332
    %528 = vmatpush.msra.mxu0 %v328
    %529 = vmatpush.msra.mxu0 %v324
    %530 = vmatpush.msra.mxu0 %v320
    %531 = vmatpush.msra.mxu0 %v316
    %532 = vmatpush.msra.mxu0 %v312
    %533 = vmatmul.f32.gmra.mxu0 %v475
    %v534 = vpop.f32.mrf.mxu0
    %v535 = vadd.f32 0.0, %v534
    %536 = vdwg.mxu0
    %537 = vmatpush.msra.mxu0 %v373
    %538 = vmatpush.msra.mxu0 %v369
    %539 = vmatpush.msra.mxu0 %v365
    %540 = vmatpush.msra.mxu0 %v361
    %541 = vmatpush.msra.mxu0 %v357
    %542 = vmatpush.msra.mxu0 %v353
    %543 = vmatpush.msra.mxu0 %v349
    %544 = vmatpush.msra.mxu0 %v345
    %545 = vmatpush.msra.mxu0 %v341
    %546 = vmatpush.msra.mxu0 %v337
    %547 = vmatpush.msra.mxu0 %v333
    %548 = vmatpush.msra.mxu0 %v329
    %549 = vmatpush.msra.mxu0 %v325
    %550 = vmatpush.msra.mxu0 %v321
    %551 = vmatpush.msra.mxu0 %v317
    %552 = vmatpush.msra.mxu0 %v313
    %553 = vmatmul.f32.gmra.mxu0 %v475
    %v554 = vpop.f32.mrf.mxu0
    %v555 = vadd.f32 0.0, %v554
    %556 = vdwg.mxu0
    %v557 = vadd.f32 %v167, %v495
    %v558 = vadd.f32 %v208, %v515
    %v559 = vadd.f32 %v249, %v535
    %v560 = vadd.f32 %v290, %v555
    %v561 = vmul.f32 %v557, 0.5
    %v562 = vmul.f32 %v558, 0.5
    %v563 = vmul.f32 %v559, 0.5
    %v564 = vtanh.pop %v561
    %v565 = vtanh.pop %v562
    %v566 = vtanh.pop %v563
    %v567 = vmul.f32 %v564, 0.5
    %v568 = vmul.f32 %v565, 0.5
    %v569 = vmul.f32 %v566, 0.5
    %v570 = vadd.f32 %v567, 0.5
    %v571 = vadd.f32 %v568, 0.5
    %v572 = vadd.f32 %v569, 0.5
    %v573 = vtanh.pop %v560
    %v574 = vmul.f32 %v473, %v570
    %v575 = vmul.f32 %v571, %v573
    %v576 = vadd.f32 %v574, %v575
    %v577 = vtanh.pop %v576
    %v578 = vmul.f32 %v572, %v577
    %579 = vst [vmem:[#allocation8 + $0x8] sm:$0xff] %v578
    %580 = vmatpush.msra.mxu0 %v370
    %581 = vmatpush.msra.mxu0 %v366
    %582 = vmatpush.msra.mxu0 %v362
    %583 = vmatpush.msra.mxu0 %v358
    %584 = vmatpush.msra.mxu0 %v354
    %585 = vmatpush.msra.mxu0 %v350
    %586 = vmatpush.msra.mxu0 %v346
    %587 = vmatpush.msra.mxu0 %v342
    %588 = vmatpush.msra.mxu0 %v338
    %589 = vmatpush.msra.mxu0 %v334
    %590 = vmatpush.msra.mxu0 %v330
    %591 = vmatpush.msra.mxu0 %v326
    %592 = vmatpush.msra.mxu0 %v322
    %593 = vmatpush.msra.mxu0 %v318
    %594 = vmatpush.msra.mxu0 %v314
    %595 = vmatpush.msra.mxu0 %v310
    %596 = vmatmul.f32.gmra.mxu0 %v578
    %v597 = vpop.f32.mrf.mxu0
    %v598 = vadd.f32 0.0, %v597
    %599 = vdwg.mxu0
    %600 = vmatpush.msra.mxu0 %v371
    %601 = vmatpush.msra.mxu0 %v367
    %602 = vmatpush.msra.mxu0 %v363
    %603 = vmatpush.msra.mxu0 %v359
    %604 = vmatpush.msra.mxu0 %v355
    %605 = vmatpush.msra.mxu0 %v351
    %606 = vmatpush.msra.mxu0 %v347
    %607 = vmatpush.msra.mxu0 %v343
    %608 = vmatpush.msra.mxu0 %v339
    %609 = vmatpush.msra.mxu0 %v335
    %610 = vmatpush.msra.mxu0 %v331
    %611 = vmatpush.msra.mxu0 %v327
    %612 = vmatpush.msra.mxu0 %v323
    %613 = vmatpush.msra.mxu0 %v319
    %614 = vmatpush.msra.mxu0 %v315
    %615 = vmatpush.msra.mxu0 %v311
    %616 = vmatmul.f32.gmra.mxu0 %v578
    %v617 = vpop.f32.mrf.mxu0
    %v618 = vadd.f32 0.0, %v617
    %619 = vdwg.mxu0
    %620 = vmatpush.msra.mxu0 %v372
    %621 = vmatpush.msra.mxu0 %v368
    %622 = vmatpush.msra.mxu0 %v364
    %623 = vmatpush.msra.mxu0 %v360
    %624 = vmatpush.msra.mxu0 %v356
    %625 = vmatpush.msra.mxu0 %v352
    %626 = vmatpush.msra.mxu0 %v348
    %627 = vmatpush.msra.mxu0 %v344
    %628 = vmatpush.msra.mxu0 %v340
    %629 = vmatpush.msra.mxu0 %v336
    %630 = vmatpush.msra.mxu0 %v332
    %631 = vmatpush.msra.mxu0 %v328
    %632 = vmatpush.msra.mxu0 %v324
    %633 = vmatpush.msra.mxu0 %v320
    %634 = vmatpush.msra.mxu0 %v316
    %635 = vmatpush.msra.mxu0 %v312
    %636 = vmatmul.f32.gmra.mxu0 %v578
    %v637 = vpop.f32.mrf.mxu0
    %v638 = vadd.f32 0.0, %v637
    %639 = vdwg.mxu0
    %640 = vmatpush.msra.mxu0 %v373
    %641 = vmatpush.msra.mxu0 %v369
    %642 = vmatpush.msra.mxu0 %v365
    %643 = vmatpush.msra.mxu0 %v361
    %644 = vmatpush.msra.mxu0 %v357
    %645 = vmatpush.msra.mxu0 %v353
    %646 = vmatpush.msra.mxu0 %v349
    %647 = vmatpush.msra.mxu0 %v345
    %648 = vmatpush.msra.mxu0 %v341
    %649 = vmatpush.msra.mxu0 %v337
    %650 = vmatpush.msra.mxu0 %v333
    %651 = vmatpush.msra.mxu0 %v329
    %652 = vmatpush.msra.mxu0 %v325
    %653 = vmatpush.msra.mxu0 %v321
    %654 = vmatpush.msra.mxu0 %v317
    %655 = vmatpush.msra.mxu0 %v313
    %656 = vmatmul.f32.gmra.mxu0 %v578
    %v657 = vpop.f32.mrf.mxu0
    %v658 = vadd.f32 0.0, %v657
    %659 = vdwg.mxu0
    %v660 = vadd.f32 %v170, %v598
    %v661 = vadd.f32 %v211, %v618
    %v662 = vadd.f32 %v252, %v638
    %v663 = vadd.f32 %v293, %v658
    %v664 = vmul.f32 %v660, 0.5
    %v665 = vmul.f32 %v661, 0.5
    %v666 = vmul.f32 %v662, 0.5
    %v667 = vtanh.pop %v664
    %v668 = vtanh.pop %v665
    %v669 = vtanh.pop %v666
    %v670 = vmul.f32 %v667, 0.5
    %v671 = vmul.f32 %v668, 0.5
    %v672 = vmul.f32 %v669, 0.5
    %v673 = vadd.f32 %v670, 0.5
    %v674 = vadd.f32 %v671, 0.5
    %v675 = vadd.f32 %v672, 0.5
    %v676 = vtanh.pop %v663
    %v677 = vmul.f32 %v576, %v673
    %v678 = vmul.f32 %v674, %v676
    %v679 = vadd.f32 %v677, %v678
    %v680 = vtanh.pop %v679
    %v681 = vmul.f32 %v675, %v680
    %682 = vst [vmem:[#allocation8 + $0x10] sm:$0xff] %v681
    %683 = vmatpush.msra.mxu0 %v370
    %684 = vmatpush.msra.mxu0 %v366
    %685 = vmatpush.msra.mxu0 %v362
    %686 = vmatpush.msra.mxu0 %v358
    %687 = vmatpush.msra.mxu0 %v354
    %688 = vmatpush.msra.mxu0 %v350
    %689 = vmatpush.msra.mxu0 %v346
    %690 = vmatpush.msra.mxu0 %v342
    %691 = vmatpush.msra.mxu0 %v338
    %692 = vmatpush.msra.mxu0 %v334
    %693 = vmatpush.msra.mxu0 %v330
    %694 = vmatpush.msra.mxu0 %v326
    %695 = vmatpush.msra.mxu0 %v322
    %696 = vmatpush.msra.mxu0 %v318
    %697 = vmatpush.msra.mxu0 %v314
    %698 = vmatpush.msra.mxu0 %v310
    %699 = vmatmul.f32.gmra.mxu0 %v681
    %v700 = vpop.f32.mrf.mxu0
    %v701 = vadd.f32 0.0, %v700
    %702 = vdwg.mxu0
    %703 = vmatpush.msra.mxu0 %v371
    %704 = vmatpush.msra.mxu0 %v367
    %705 = vmatpush.msra.mxu0 %v363
    %706 = vmatpush.msra.mxu0 %v359
    %707 = vmatpush.msra.mxu0 %v355
    %708 = vmatpush.msra.mxu0 %v351
    %709 = vmatpush.msra.mxu0 %v347
    %710 = vmatpush.msra.mxu0 %v343
    %711 = vmatpush.msra.mxu0 %v339
    %712 = vmatpush.msra.mxu0 %v335
    %713 = vmatpush.msra.mxu0 %v331
    %714 = vmatpush.msra.mxu0 %v327
    %715 = vmatpush.msra.mxu0 %v323
    %716 = vmatpush.msra.mxu0 %v319
    %717 = vmatpush.msra.mxu0 %v315
    %718 = vmatpush.msra.mxu0 %v311
    %719 = vmatmul.f32.gmra.mxu0 %v681
    %v720 = vpop.f32.mrf.mxu0
    %v721 = vadd.f32 0.0, %v720
    %722 = vdwg.mxu0
    %723 = vmatpush.msra.mxu0 %v372
    %724 = vmatpush.msra.mxu0 %v368
    %725 = vmatpush.msra.mxu0 %v364
    %726 = vmatpush.msra.mxu0 %v360
    %727 = vmatpush.msra.mxu0 %v356
    %728 = vmatpush.msra.mxu0 %v352
    %729 = vmatpush.msra.mxu0 %v348
    %730 = vmatpush.msra.mxu0 %v344
    %731 = vmatpush.msra.mxu0 %v340
    %732 = vmatpush.msra.mxu0 %v336
    %733 = vmatpush.msra.mxu0 %v332
    %734 = vmatpush.msra.mxu0 %v328
    %735 = vmatpush.msra.mxu0 %v324
    %736 = vmatpush.msra.mxu0 %v320
    %737 = vmatpush.msra.mxu0 %v316
    %738 = vmatpush.msra.mxu0 %v312
    %739 = vmatmul.f32.gmra.mxu0 %v681
    %v740 = vpop.f32.mrf.mxu0
    %v741 = vadd.f32 0.0, %v740
    %742 = vdwg.mxu0
    %743 = vmatpush.msra.mxu0 %v373
    %744 = vmatpush.msra.mxu0 %v369
    %745 = vmatpush.msra.mxu0 %v365
    %746 = vmatpush.msra.mxu0 %v361
    %747 = vmatpush.msra.mxu0 %v357
    %748 = vmatpush.msra.mxu0 %v353
    %749 = vmatpush.msra.mxu0 %v349
    %750 = vmatpush.msra.mxu0 %v345
    %751 = vmatpush.msra.mxu0 %v341
    %752 = vmatpush.msra.mxu0 %v337
    %753 = vmatpush.msra.mxu0 %v333
    %754 = vmatpush.msra.mxu0 %v329
    %755 = vmatpush.msra.mxu0 %v325
    %756 = vmatpush.msra.mxu0 %v321
    %757 = vmatpush.msra.mxu0 %v317
    %758 = vmatpush.msra.mxu0 %v313
    %759 = vmatmul.f32.gmra.mxu0 %v681
    %v760 = vpop.f32.mrf.mxu0
    %v761 = vadd.f32 0.0, %v760
    %762 = vdwg.mxu0
    %v763 = vadd.f32 %v173, %v701
    %v764 = vadd.f32 %v214, %v721
    %v765 = vadd.f32 %v255, %v741
    %v766 = vadd.f32 %v296, %v761
    %v767 = vmul.f32 %v763, 0.5
    %v768 = vmul.f32 %v764, 0.5
    %v769 = vmul.f32 %v765, 0.5
    %v770 = vtanh.pop %v767
    %v771 = vtanh.pop %v768
    %v772 = vtanh.pop %v769
    %v773 = vmul.f32 %v770, 0.5
    %v774 = vmul.f32 %v771, 0.5
    %v775 = vmul.f32 %v772, 0.5
    %v776 = vadd.f32 %v773, 0.5
    %v777 = vadd.f32 %v774, 0.5
    %v778 = vadd.f32 %v775, 0.5
    %v779 = vtanh.pop %v766
    %v780 = vmul.f32 %v679, %v776
    %v781 = vmul.f32 %v777, %v779
    %v782 = vadd.f32 %v780, %v781
    %v783 = vtanh.pop %v782
    %v784 = vmul.f32 %v778, %v783
    %785 = vst [vmem:[#allocation8 + $0x18] sm:$0xff] %v784
    %786 = vmatpush.msra.mxu0 %v370
    %787 = vmatpush.msra.mxu0 %v366
    %788 = vmatpush.msra.mxu0 %v362
    %789 = vmatpush.msra.mxu0 %v358
    %790 = vmatpush.msra.mxu0 %v354
    %791 = vmatpush.msra.mxu0 %v350
    %792 = vmatpush.msra.mxu0 %v346
    %793 = vmatpush.msra.mxu0 %v342
    %794 = vmatpush.msra.mxu0 %v338
    %795 = vmatpush.msra.mxu0 %v334
    %796 = vmatpush.msra.mxu0 %v330
    %797 = vmatpush.msra.mxu0 %v326
    %798 = vmatpush.msra.mxu0 %v322
    %799 = vmatpush.msra.mxu0 %v318
    %800 = vmatpush.msra.mxu0 %v314
    %801 = vmatpush.msra.mxu0 %v310
    %802 = vmatmul.f32.gmra.mxu0 %v784
    %v803 = vpop.f32.mrf.mxu0
    %v804 = vadd.f32 0.0, %v803
    %805 = vdwg.mxu0
    %806 = vmatpush.msra.mxu0 %v371
    %807 = vmatpush.msra.mxu0 %v367
    %808 = vmatpush.msra.mxu0 %v363
    %809 = vmatpush.msra.mxu0 %v359
    %810 = vmatpush.msra.mxu0 %v355
    %811 = vmatpush.msra.mxu0 %v351
    %812 = vmatpush.msra.mxu0 %v347
    %813 = vmatpush.msra.mxu0 %v343
    %814 = vmatpush.msra.mxu0 %v339
    %815 = vmatpush.msra.mxu0 %v335
    %816 = vmatpush.msra.mxu0 %v331
    %817 = vmatpush.msra.mxu0 %v327
    %818 = vmatpush.msra.mxu0 %v323
    %819 = vmatpush.msra.mxu0 %v319
    %820 = vmatpush.msra.mxu0 %v315
    %821 = vmatpush.msra.mxu0 %v311
    %822 = vmatmul.f32.gmra.mxu0 %v784
    %v823 = vpop.f32.mrf.mxu0
    %v824 = vadd.f32 0.0, %v823
    %825 = vdwg.mxu0
    %826 = vmatpush.msra.mxu0 %v372
    %827 = vmatpush.msra.mxu0 %v368
    %828 = vmatpush.msra.mxu0 %v364
    %829 = vmatpush.msra.mxu0 %v360
    %830 = vmatpush.msra.mxu0 %v356
    %831 = vmatpush.msra.mxu0 %v352
    %832 = vmatpush.msra.mxu0 %v348
    %833 = vmatpush.msra.mxu0 %v344
    %834 = vmatpush.msra.mxu0 %v340
    %835 = vmatpush.msra.mxu0 %v336
    %836 = vmatpush.msra.mxu0 %v332
    %837 = vmatpush.msra.mxu0 %v328
    %838 = vmatpush.msra.mxu0 %v324
    %839 = vmatpush.msra.mxu0 %v320
    %840 = vmatpush.msra.mxu0 %v316
    %841 = vmatpush.msra.mxu0 %v312
    %842 = vmatmul.f32.gmra.mxu0 %v784
    %v843 = vpop.f32.mrf.mxu0
    %v844 = vadd.f32 0.0, %v843
    %845 = vdwg.mxu0
    %846 = vmatpush.msra.mxu0 %v373
    %847 = vmatpush.msra.mxu0 %v369
    %848 = vmatpush.msra.mxu0 %v365
    %849 = vmatpush.msra.mxu0 %v361
    %850 = vmatpush.msra.mxu0 %v357
    %851 = vmatpush.msra.mxu0 %v353
    %852 = vmatpush.msra.mxu0 %v349
    %853 = vmatpush.msra.mxu0 %v345
    %854 = vmatpush.msra.mxu0 %v341
    %855 = vmatpush.msra.mxu0 %v337
    %856 = vmatpush.msra.mxu0 %v333
    %857 = vmatpush.msra.mxu0 %v329
    %858 = vmatpush.msra.mxu0 %v325
    %859 = vmatpush.msra.mxu0 %v321
    %860 = vmatpush.msra.mxu0 %v317
    %861 = vmatpush.msra.mxu0 %v313
    %862 = vmatmul.f32.gmra.mxu0 %v784
    %v863 = vpop.f32.mrf.mxu0
    %v864 = vadd.f32 0.0, %v863
    %865 = vdwg.mxu0
    %v866 = vadd.f32 %v176, %v804
    %v867 = vadd.f32 %v217, %v824
    %v868 = vadd.f32 %v258, %v844
    %v869 = vadd.f32 %v299, %v864
    %v870 = vmul.f32 %v866, 0.5
    %v871 = vmul.f32 %v867, 0.5
    %v872 = vmul.f32 %v868, 0.5
    %v873 = vtanh.pop %v870
    %v874 = vtanh.pop %v871
    %v875 = vtanh.pop %v872
    %v876 = vmul.f32 %v873, 0.5
    %v877 = vmul.f32 %v874, 0.5
    %v878 = vmul.f32 %v875, 0.5
    %v879 = vadd.f32 %v876, 0.5
    %v880 = vadd.f32 %v877, 0.5
    %v881 = vadd.f32 %v878, 0.5
    %v882 = vtanh.pop %v869
    %v883 = vmul.f32 %v782, %v879
    %v884 = vmul.f32 %v880, %v882
    %v885 = vadd.f32 %v883, %v884
    %v886 = vtanh.pop %v885
    %v887 = vmul.f32 %v881, %v886
    %888 = vst [vmem:[#allocation8 + $0x20] sm:$0xff] %v887
    %889 = vmatpush.msra.mxu0 %v370
    %890 = vmatpush.msra.mxu0 %v366
    %891 = vmatpush.msra.mxu0 %v362
    %892 = vmatpush.msra.mxu0 %v358
    %893 = vmatpush.msra.mxu0 %v354
    %894 = vmatpush.msra.mxu0 %v350
    %895 = vmatpush.msra.mxu0 %v346
    %896 = vmatpush.msra.mxu0 %v342
    %897 = vmatpush.msra.mxu0 %v338
    %898 = vmatpush.msra.mxu0 %v334
    %899 = vmatpush.msra.mxu0 %v330
    %900 = vmatpush.msra.mxu0 %v326
    %901 = vmatpush.msra.mxu0 %v322
    %902 = vmatpush.msra.mxu0 %v318
    %903 = vmatpush.msra.mxu0 %v314
    %904 = vmatpush.msra.mxu0 %v310
    %905 = vmatmul.f32.gmra.mxu0 %v887
    %v906 = vpop.f32.mrf.mxu0
    %v907 = vadd.f32 0.0, %v906
    %908 = vdwg.mxu0
    %909 = vmatpush.msra.mxu0 %v371
    %910 = vmatpush.msra.mxu0 %v367
    %911 = vmatpush.msra.mxu0 %v363
    %912 = vmatpush.msra.mxu0 %v359
    %913 = vmatpush.msra.mxu0 %v355
    %914 = vmatpush.msra.mxu0 %v351
    %915 = vmatpush.msra.mxu0 %v347
    %916 = vmatpush.msra.mxu0 %v343
    %917 = vmatpush.msra.mxu0 %v339
    %918 = vmatpush.msra.mxu0 %v335
    %919 = vmatpush.msra.mxu0 %v331
    %920 = vmatpush.msra.mxu0 %v327
    %921 = vmatpush.msra.mxu0 %v323
    %922 = vmatpush.msra.mxu0 %v319
    %923 = vmatpush.msra.mxu0 %v315
    %924 = vmatpush.msra.mxu0 %v311
    %925 = vmatmul.f32.gmra.mxu0 %v887
    %v926 = vpop.f32.mrf.mxu0
    %v927 = vadd.f32 0.0, %v926
    %928 = vdwg.mxu0
    %929 = vmatpush.msra.mxu0 %v372
    %930 = vmatpush.msra.mxu0 %v368
    %931 = vmatpush.msra.mxu0 %v364
    %932 = vmatpush.msra.mxu0 %v360
    %933 = vmatpush.msra.mxu0 %v356
    %934 = vmatpush.msra.mxu0 %v352
    %935 = vmatpush.msra.mxu0 %v348
    %936 = vmatpush.msra.mxu0 %v344
    %937 = vmatpush.msra.mxu0 %v340
    %938 = vmatpush.msra.mxu0 %v336
    %939 = vmatpush.msra.mxu0 %v332
    %940 = vmatpush.msra.mxu0 %v328
    %941 = vmatpush.msra.mxu0 %v324
    %942 = vmatpush.msra.mxu0 %v320
    %943 = vmatpush.msra.mxu0 %v316
    %944 = vmatpush.msra.mxu0 %v312
    %945 = vmatmul.f32.gmra.mxu0 %v887
    %v946 = vpop.f32.mrf.mxu0
    %v947 = vadd.f32 0.0, %v946
    %948 = vdwg.mxu0
    %949 = vmatpush.msra.mxu0 %v373
    %950 = vmatpush.msra.mxu0 %v369
    %951 = vmatpush.msra.mxu0 %v365
    %952 = vmatpush.msra.mxu0 %v361
    %953 = vmatpush.msra.mxu0 %v357
    %954 = vmatpush.msra.mxu0 %v353
    %955 = vmatpush.msra.mxu0 %v349
    %956 = vmatpush.msra.mxu0 %v345
    %957 = vmatpush.msra.mxu0 %v341
    %958 = vmatpush.msra.mxu0 %v337
    %959 = vmatpush.msra.mxu0 %v333
    %960 = vmatpush.msra.mxu0 %v329
    %961 = vmatpush.msra.mxu0 %v325
    %962 = vmatpush.msra.mxu0 %v321
    %963 = vmatpush.msra.mxu0 %v317
    %964 = vmatpush.msra.mxu0 %v313
    %965 = vmatmul.f32.gmra.mxu0 %v887
    %v966 = vpop.f32.mrf.mxu0
    %v967 = vadd.f32 0.0, %v966
    %968 = vdwg.mxu0
    %v969 = vadd.f32 %v179, %v907
    %v970 = vadd.f32 %v220, %v927
    %v971 = vadd.f32 %v261, %v947
    %v972 = vadd.f32 %v302, %v967
    %v973 = vmul.f32 %v969, 0.5
    %v974 = vmul.f32 %v970, 0.5
    %v975 = vmul.f32 %v971, 0.5
    %v976 = vtanh.pop %v973
    %v977 = vtanh.pop %v974
    %v978 = vtanh.pop %v975
    %v979 = vmul.f32 %v976, 0.5
    %v980 = vmul.f32 %v977, 0.5
    %v981 = vmul.f32 %v978, 0.5
    %v982 = vadd.f32 %v979, 0.5
    %v983 = vadd.f32 %v980, 0.5
    %v984 = vadd.f32 %v981, 0.5
    %v985 = vtanh.pop %v972
    %v986 = vmul.f32 %v885, %v982
    %v987 = vmul.f32 %v983, %v985
    %v988 = vadd.f32 %v986, %v987
    %v989 = vtanh.pop %v988
    %v990 = vmul.f32 %v984, %v989
    %991 = vst [vmem:[#allocation8 + $0x28] sm:$0xff] %v990
    %992 = vmatpush.msra.mxu0 %v370
    %993 = vmatpush.msra.mxu0 %v366
    %994 = vmatpush.msra.mxu0 %v362
    %995 = vmatpush.msra.mxu0 %v358
    %996 = vmatpush.msra.mxu0 %v354
    %997 = vmatpush.msra.mxu0 %v350
    %998 = vmatpush.msra.mxu0 %v346
    %999 = vmatpush.msra.mxu0 %v342
    %1000 = vmatpush.msra.mxu0 %v338
    %1001 = vmatpush.msra.mxu0 %v334
    %1002 = vmatpush.msra.mxu0 %v330
    %1003 = vmatpush.msra.mxu0 %v326
    %1004 = vmatpush.msra.mxu0 %v322
    %1005 = vmatpush.msra.mxu0 %v318
    %1006 = vmatpush.msra.mxu0 %v314
    %1007 = vmatpush.msra.mxu0 %v310
    %1008 = vmatmul.f32.gmra.mxu0 %v990
    %v1009 = vpop.f32.mrf.mxu0
    %v1010 = vadd.f32 0.0, %v1009
    %1011 = vdwg.mxu0
    %1012 = vmatpush.msra.mxu0 %v371
    %1013 = vmatpush.msra.mxu0 %v367
    %1014 = vmatpush.msra.mxu0 %v363
    %1015 = vmatpush.msra.mxu0 %v359
    %1016 = vmatpush.msra.mxu0 %v355
    %1017 = vmatpush.msra.mxu0 %v351
    %1018 = vmatpush.msra.mxu0 %v347
    %1019 = vmatpush.msra.mxu0 %v343
    %1020 = vmatpush.msra.mxu0 %v339
    %1021 = vmatpush.msra.mxu0 %v335
    %1022 = vmatpush.msra.mxu0 %v331
    %1023 = vmatpush.msra.mxu0 %v327
    %1024 = vmatpush.msra.mxu0 %v323
    %1025 = vmatpush.msra.mxu0 %v319
    %1026 = vmatpush.msra.mxu0 %v315
    %1027 = vmatpush.msra.mxu0 %v311
    %1028 = vmatmul.f32.gmra.mxu0 %v990
    %v1029 = vpop.f32.mrf.mxu0
    %v1030 = vadd.f32 0.0, %v1029
    %1031 = vdwg.mxu0
    %1032 = vmatpush.msra.mxu0 %v372
    %1033 = vmatpush.msra.mxu0 %v368
    %1034 = vmatpush.msra.mxu0 %v364
    %1035 = vmatpush.msra.mxu0 %v360
    %1036 = vmatpush.msra.mxu0 %v356
    %1037 = vmatpush.msra.mxu0 %v352
    %1038 = vmatpush.msra.mxu0 %v348
    %1039 = vmatpush.msra.mxu0 %v344
    %1040 = vmatpush.msra.mxu0 %v340
    %1041 = vmatpush.msra.mxu0 %v336
    %1042 = vmatpush.msra.mxu0 %v332
    %1043 = vmatpush.msra.mxu0 %v328
    %1044 = vmatpush.msra.mxu0 %v324
    %1045 = vmatpush.msra.mxu0 %v320
    %1046 = vmatpush.msra.mxu0 %v316
    %1047 = vmatpush.msra.mxu0 %v312
    %1048 = vmatmul.f32.gmra.mxu0 %v990
    %v1049 = vpop.f32.mrf.mxu0
    %v1050 = vadd.f32 0.0, %v1049
    %1051 = vdwg.mxu0
    %1052 = vmatpush.msra.mxu0 %v373
    %1053 = vmatpush.msra.mxu0 %v369
    %1054 = vmatpush.msra.mxu0 %v365
    %1055 = vmatpush.msra.mxu0 %v361
    %1056 = vmatpush.msra.mxu0 %v357
    %1057 = vmatpush.msra.mxu0 %v353
    %1058 = vmatpush.msra.mxu0 %v349
    %1059 = vmatpush.msra.mxu0 %v345
    %1060 = vmatpush.msra.mxu0 %v341
    %1061 = vmatpush.msra.mxu0 %v337
    %1062 = vmatpush.msra.mxu0 %v333
    %1063 = vmatpush.msra.mxu0 %v329
    %1064 = vmatpush.msra.mxu0 %v325
    %1065 = vmatpush.msra.mxu0 %v321
    %1066 = vmatpush.msra.mxu0 %v317
    %1067 = vmatpush.msra.mxu0 %v313
    %1068 = vmatmul.f32.gmra.mxu0 %v990
    %v1069 = vpop.f32.mrf.mxu0
    %v1070 = vadd.f32 0.0, %v1069
    %1071 = vdwg.mxu0
    %v1072 = vadd.f32 %v182, %v1010
    %v1073 = vadd.f32 %v223, %v1030
    %v1074 = vadd.f32 %v264, %v1050
    %v1075 = vadd.f32 %v305, %v1070
    %v1076 = vmul.f32 %v1072, 0.5
    %v1077 = vmul.f32 %v1073, 0.5
    %v1078 = vmul.f32 %v1074, 0.5
    %v1079 = vtanh.pop %v1076
    %v1080 = vtanh.pop %v1077
    %v1081 = vtanh.pop %v1078
    %v1082 = vmul.f32 %v1079, 0.5
    %v1083 = vmul.f32 %v1080, 0.5
    %v1084 = vmul.f32 %v1081, 0.5
    %v1085 = vadd.f32 %v1082, 0.5
    %v1086 = vadd.f32 %v1083, 0.5
    %v1087 = vadd.f32 %v1084, 0.5
    %v1088 = vtanh.pop %v1075
    %v1089 = vmul.f32 %v988, %v1085
    %v1090 = vmul.f32 %v1086, %v1088
    %v1091 = vadd.f32 %v1089, %v1090
    %v1092 = vtanh.pop %v1091
    %v1093 = vmul.f32 %v1087, %v1092
    %1094 = vst [vmem:[#allocation8 + $0x30] sm:$0xff] %v1093
    %1095 = vmatpush.msra.mxu0 %v370
    %1096 = vmatpush.msra.mxu0 %v366
    %1097 = vmatpush.msra.mxu0 %v362
    %1098 = vmatpush.msra.mxu0 %v358
    %1099 = vmatpush.msra.mxu0 %v354
    %1100 = vmatpush.msra.mxu0 %v350
    %1101 = vmatpush.msra.mxu0 %v346
    %1102 = vmatpush.msra.mxu0 %v342
    %1103 = vmatpush.msra.mxu0 %v338
    %1104 = vmatpush.msra.mxu0 %v334
    %1105 = vmatpush.msra.mxu0 %v330
    %1106 = vmatpush.msra.mxu0 %v326
    %1107 = vmatpush.msra.mxu0 %v322
    %1108 = vmatpush.msra.mxu0 %v318
    %1109 = vmatpush.msra.mxu0 %v314
    %1110 = vmatpush.msra.mxu0 %v310
    %1111 = vmatmul.f32.gmra.mxu0 %v1093
    %v1112 = vpop.f32.mrf.mxu0
    %v1113 = vadd.f32 0.0, %v1112
    %1114 = vdwg.mxu0
    %1115 = vmatpush.msra.mxu0 %v371
    %1116 = vmatpush.msra.mxu0 %v367
    %1117 = vmatpush.msra.mxu0 %v363
    %1118 = vmatpush.msra.mxu0 %v359
    %1119 = vmatpush.msra.mxu0 %v355
    %1120 = vmatpush.msra.mxu0 %v351
    %1121 = vmatpush.msra.mxu0 %v347
    %1122 = vmatpush.msra.mxu0 %v343
    %1123 = vmatpush.msra.mxu0 %v339
    %1124 = vmatpush.msra.mxu0 %v335
    %1125 = vmatpush.msra.mxu0 %v331
    %1126 = vmatpush.msra.mxu0 %v327
    %1127 = vmatpush.msra.mxu0 %v323
    %1128 = vmatpush.msra.mxu0 %v319
    %1129 = vmatpush.msra.mxu0 %v315
    %1130 = vmatpush.msra.mxu0 %v311
    %1131 = vmatmul.f32.gmra.mxu0 %v1093
    %v1132 = vpop.f32.mrf.mxu0
    %v1133 = vadd.f32 0.0, %v1132
    %1134 = vdwg.mxu0
    %1135 = vmatpush.msra.mxu0 %v372
    %1136 = vmatpush.msra.mxu0 %v368
    %1137 = vmatpush.msra.mxu0 %v364
    %1138 = vmatpush.msra.mxu0 %v360
    %1139 = vmatpush.msra.mxu0 %v356
    %1140 = vmatpush.msra.mxu0 %v352
    %1141 = vmatpush.msra.mxu0 %v348
    %1142 = vmatpush.msra.mxu0 %v344
    %1143 = vmatpush.msra.mxu0 %v340
    %1144 = vmatpush.msra.mxu0 %v336
    %1145 = vmatpush.msra.mxu0 %v332
    %1146 = vmatpush.msra.mxu0 %v328
    %1147 = vmatpush.msra.mxu0 %v324
    %1148 = vmatpush.msra.mxu0 %v320
    %1149 = vmatpush.msra.mxu0 %v316
    %1150 = vmatpush.msra.mxu0 %v312
    %1151 = vmatmul.f32.gmra.mxu0 %v1093
    %v1152 = vpop.f32.mrf.mxu0
    %v1153 = vadd.f32 0.0, %v1152
    %1154 = vdwg.mxu0
    %1155 = vmatpush.msra.mxu0 %v373
    %1156 = vmatpush.msra.mxu0 %v369
    %1157 = vmatpush.msra.mxu0 %v365
    %1158 = vmatpush.msra.mxu0 %v361
    %1159 = vmatpush.msra.mxu0 %v357
    %1160 = vmatpush.msra.mxu0 %v353
    %1161 = vmatpush.msra.mxu0 %v349
    %1162 = vmatpush.msra.mxu0 %v345
    %1163 = vmatpush.msra.mxu0 %v341
    %1164 = vmatpush.msra.mxu0 %v337
    %1165 = vmatpush.msra.mxu0 %v333
    %1166 = vmatpush.msra.mxu0 %v329
    %1167 = vmatpush.msra.mxu0 %v325
    %1168 = vmatpush.msra.mxu0 %v321
    %1169 = vmatpush.msra.mxu0 %v317
    %1170 = vmatpush.msra.mxu0 %v313
    %1171 = vmatmul.f32.gmra.mxu0 %v1093
    %v1172 = vpop.f32.mrf.mxu0
    %v1173 = vadd.f32 0.0, %v1172
    %1174 = vdwg.mxu0
    %v1175 = vadd.f32 %v185, %v1113
    %v1176 = vadd.f32 %v226, %v1133
    %v1177 = vadd.f32 %v267, %v1153
    %v1178 = vadd.f32 %v308, %v1173
    %v1179 = vmul.f32 %v1175, 0.5
    %v1180 = vmul.f32 %v1176, 0.5
    %v1181 = vmul.f32 %v1177, 0.5
    %v1182 = vtanh.pop %v1179
    %v1183 = vtanh.pop %v1180
    %v1184 = vtanh.pop %v1181
    %v1185 = vmul.f32 %v1182, 0.5
    %v1186 = vmul.f32 %v1183, 0.5
    %v1187 = vmul.f32 %v1184, 0.5
    %v1188 = vadd.f32 %v1185, 0.5
    %v1189 = vadd.f32 %v1186, 0.5
    %v1190 = vadd.f32 %v1187, 0.5
    %v1191 = vtanh.pop %v1178
    %v1192 = vmul.f32 %v1091, %v1188
    %v1193 = vmul.f32 %v1189, %v1191
    %v1194 = vadd.f32 %v1192, %v1193
    %v1195 = vtanh.pop %v1194
    %v1196 = vmul.f32 %v1190, %v1195
    %1197 = vst [vmem:[#allocation8 + $0x38] sm:$0xff] %v1196
    %v1198 = vld [vmem:[#allocation7] sm:$0xff]
    %v1199 = vld [vmem:[#allocation7 + $0x8] sm:$0xff]
    %v1200 = vld [vmem:[#allocation7 + $0x10] sm:$0xff]
    %v1201 = vld [vmem:[#allocation7 + $0x18] sm:$0xff]
    %v1202 = vld [vmem:[#allocation7 + $0x20] sm:$0xff]
    %v1203 = vld [vmem:[#allocation7 + $0x28] sm:$0xff]
    %v1204 = vld [vmem:[#allocation7 + $0x30] sm:$0xff]
    %v1205 = vld [vmem:[#allocation7 + $0x38] sm:$0xff]
    %v1206 = vld [vmem:[#allocation7 + $0x40] sm:$0xff]
    %v1207 = vld [vmem:[#allocation7 + $0x48] sm:$0xff]
    %v1208 = vld [vmem:[#allocation7 + $0x50] sm:$0xff]
    %v1209 = vld [vmem:[#allocation7 + $0x58] sm:$0xff]
    %v1210 = vld [vmem:[#allocation7 + $0x60] sm:$0xff]
    %v1211 = vld [vmem:[#allocation7 + $0x68] sm:$0xff]
    %v1212 = vld [vmem:[#allocation7 + $0x70] sm:$0xff]
    %v1213 = vld [vmem:[#allocation7 + $0x78] sm:$0xff]
    %v1214 = vld [vmem:[%s5] sm:$0x1]
    %v1216 = vperm.slane %v1214, 0
    %1218 = vmatpush.msra.mxu0 %v1213
    %1219 = vmatpush.msra.mxu0 %v1212
    %1220 = vmatpush.msra.mxu0 %v1211
    %1221 = vmatpush.msra.mxu0 %v1210
    %1222 = vmatpush.msra.mxu0 %v1209
    %1223 = vmatpush.msra.mxu0 %v1208
    %1224 = vmatpush.msra.mxu0 %v1207
    %1225 = vmatpush.msra.mxu0 %v1206
    %1226 = vmatpush.msra.mxu0 %v1205
    %1227 = vmatpush.msra.mxu0 %v1204
    %1228 = vmatpush.msra.mxu0 %v1203
    %1229 = vmatpush.msra.mxu0 %v1202
    %1230 = vmatpush.msra.mxu0 %v1201
    %1231 = vmatpush.msra.mxu0 %v1200
    %1232 = vmatpush.msra.mxu0 %v1199
    %1233 = vmatpush.msra.mxu0 %v1198
    %1234 = vmatmul.f32.gmra.mxu0 %v1196
    %v1235 = vpop.f32.mrf.mxu0
    %v1236 = vadd.f32 %v1216, %v1235
    %1237 = vdwg.mxu0
    %1238 = vst [vmem:[#allocation9] sm:$0xff] %v1236
    // Predicated region
    $region38: #{tpu_custom_call.1} parent=1 // pred_check
      _
    $region39: #{tpu_custom_call.1} parent=1 // pred_check_branch
      %1240 = sbr.rel (0) target = $region41
    $region40: #{tpu_custom_call.1} parent=1 // pred_region
      %1242 = vsyncadd [#allocation4], 0
      %s1243 = sshll.u32 [#allocation8], 4
      %s1244 = int_to_ptr.vmem [resolvable:$true] %s1243
      %s1245 = sshll.u32 %s6, 4
      %s1246 = int_to_ptr.hbm [resolvable:$true] %s1245
      %1251 = dma.vmem_to_hbm [thread:$0]  %s1244, 1024, %s1246, [#allocation4], 128, 128, 8
    $region41: #{tpu_custom_call.1} parent=1 // pred_fallthru
      _
    // Predicated region
    $region42: #{tpu_custom_call.1} parent=1 // pred_check
      _
    $region43: #{tpu_custom_call.1} parent=1 // pred_check_branch
      %1253 = sbr.rel (0) target = $region45
    $region44: #{tpu_custom_call.1} parent=1 // pred_region
      %1255 = vsyncadd [#allocation10], 0
      %s1257 = sshll.u32 [#allocation9], 4
      %s1258 = int_to_ptr.vmem [resolvable:$true] %s1257
      %s1259 = sshll.u32 %s7, 4
      %s1260 = int_to_ptr.hbm [resolvable:$true] %s1259
      %1262 = dma.vmem_to_hbm [thread:$0]  %s1258, 128, %s1260, [#allocation10]
    $region45: #{tpu_custom_call.1} parent=1 // pred_fallthru
      _
    // Predicated region
    $region46: #{tpu_custom_call.1} parent=1 // pred_check
      _
    $region47: #{tpu_custom_call.1} parent=1 // pred_check_branch
      %1264 = sbr.rel (0) target = $region49
    $region48: #{tpu_custom_call.1} parent=1 // pred_region
      %1266 = dma.done [#allocation4], 1024
    $region49: #{tpu_custom_call.1} parent=1 // pred_fallthru
      _
    // Predicated region
    $region50: #{tpu_custom_call.1} parent=1 // pred_check
      _
    $region51: #{tpu_custom_call.1} parent=1 // pred_check_branch
      %1268 = sbr.rel (0) target = $region53
    $region52: #{tpu_custom_call.1} parent=1 // pred_region
      %1270 = dma.done [#allocation10], 128
    $region53: #{tpu_custom_call.1} parent=1 // pred_fallthru
      _
    %1271 = vsyncpa [#allocation3], 1
    %1272 = vsyncpa [#allocation6], 1
    %1273 = vsyncpa [#allocation4], 1
    %1274 = vsyncpa [#allocation10], 1

</llo_original>
